<compile_context>
chip_gen: v7x
topology: tpu7x:2x2x1
jax: 0.10.0
libtpu: 0.0.40
codegen_flags: <defaults>
</compile_context>

<pallas_src>
import functools
import math

import jax
import jax.numpy as jnp
from jax.experimental import pallas as pl
from jax.experimental.pallas import tpu as pltpu

LN_EPS = 1e-5
_MIB = 1024 * 1024
_VMEM_CAP = 64 * _MIB   # v7x physical VMEM is 64 MiB; may be raised to ~96 MiB on v5e/v6e.


def _layernorm(x, gamma, beta):
    # Numerically stable two-pass form (matches nn.LayerNorm / the f32 reference).
    mu = jnp.mean(x, axis=-1, keepdims=True)
    xc = x - mu
    var = jnp.mean(xc * xc, axis=-1, keepdims=True)
    return xc * jax.lax.rsqrt(var + LN_EPS) * gamma + beta


def _pick_tile(s):
    # Prefer 256: large enough to amortize the ~0.35 us/step grid overhead, small enough that
    # the (H, tq, tk) f32 softmax intermediates + weights fit v7x's 64 MiB VMEM, and it keeps
    # B * (S // tq) >= 2 so the parallel grid axes split across v7x's two TensorCores.
    for t in (256, 512, 128, 64, 32, 16, 8):
        if s % t == 0:
            return t
    return s


def _const_spec(shape, index_map, single_buffer):
    # Constant-index operands (weights / biases / LN params) never change block index, so
    # they do not need double buffering; Buffered(1) halves their VMEM residency.
    if single_buffer:
        return pl.BlockSpec(shape, index_map, pipeline_mode=pl.Buffered(1))
    return pl.BlockSpec(shape, index_map)


# --------------------------------------------------------------------------------------
# Kernel 1: LayerNorm + Q / fused K|V projection, once per token (hoisted out of the
# q-block loop).  Outputs are head-major (B, H, S, HD) bf16, Q pre-scaled by 1/sqrt(HD),
# all biases applied here (hoisted out of the attention inner loop).
# --------------------------------------------------------------------------------------
def qkv_projection_kernel(srb1_ref, srb2_ref, wq_ref, bq_ref, wkv_ref, bkv_ref,
                          g1_ref, be1_ref, q_ref, k_ref, v_ref, *, num_heads):
    _, tm, D = srb1_ref.shape
    H = num_heads
    HD = D // H
    scale = 1.0 / math.sqrt(HD)
    g1 = g1_ref[0]
    be1 = be1_ref[0]

    n1 = _layernorm(srb1_ref[0].astype(jnp.float32), g1, be1).astype(jnp.bfloat16)
    q = jnp.dot(n1, wq_ref[...], preferred_element_type=jnp.float32) + bq_ref[0]
    q16 = (q * scale).astype(jnp.bfloat16)                       # (tm, D)

    n2 = _layernorm(srb2_ref[0].astype(jnp.float32), g1, be1).astype(jnp.bfloat16)
    kv = jnp.dot(n2, wkv_ref[...], preferred_element_type=jnp.float32) + bkv_ref[0]
    kv16 = kv.astype(jnp.bfloat16)                               # (tm, 2D)

    # Static per-head column slices -> head-major stores (no XLU transpose in any kernel).
    for h in range(H):
        lo = h * HD
        q_ref[0, h] = q16[:, lo:lo + HD]
        k_ref[0, h] = kv16[:, lo:lo + HD]
        v_ref[0, h] = kv16[:, D + lo:D + lo + HD]


# --------------------------------------------------------------------------------------
# Kernel 2: flash attention over pre-projected head-major Q/K/V + fused epilogue
# (output projection, residual add, final LayerNorm).
# --------------------------------------------------------------------------------------
def attention_kernel(q_ref, k_ref, v_ref, srb1_ref, wo_ref, bo_ref, g2_ref, be2_ref,
                     o_ref, m_sc, l_sc, acc_sc, *, exp_dtype):
    ki = pl.program_id(2)

    @pl.when(ki == 0)
    def _init():
        m_sc[...] = jnp.full_like(m_sc, -jnp.inf)
        l_sc[...] = jnp.zeros_like(l_sc)
        acc_sc[...] = jnp.zeros_like(acc_sc)

    # (H, tq, HD) x (H, tk, HD) -> (H, tq, tk); Q already carries the 1/sqrt(HD) scale
    # and the key bias is dropped (softmax is invariant to a per-q-row constant).
    s = jnp.einsum('hqd,hkd->hqk', q_ref[0], k_ref[0],
                   preferred_element_type=jnp.float32)

    m_prev = m_sc[...]
    m_new = jnp.maximum(m_prev, jnp.max(s, axis=-1, keepdims=True))
    alpha = jnp.exp(m_prev - m_new)
    # exp_dtype=jnp.bfloat16 is profitable on v6e/v7x (bf16 EUP); keep f32 on v5e.
    p = jnp.exp((s - m_new).astype(exp_dtype))
    # TODO(synk): attention dropout omitted (inference / p = 0 semantics).
    l_sc[...] = alpha * l_sc[...] + jnp.sum(p.astype(jnp.float32), axis=-1, keepdims=True)
    acc_sc[...] = alpha * acc_sc[...] + jnp.einsum(
        'hqk,hkd->hqd', p.astype(jnp.bfloat16), v_ref[0],
        preferred_element_type=jnp.float32)
    m_sc[...] = m_new

    @pl.when(ki == pl.num_programs(2) - 1)
    def _finalize():
        H = acc_sc.shape[0]
        inv_l = pl.reciprocal(l_sc[...], approx=True)            # EUP, not a VPU divide
        ctx = acc_sc[...] * inv_l                                 # (H, tq, HD) f32
        # merge heads lane-dense -> (tq, D) for the MXU and the (lane-dense) output store
        merged = jnp.concatenate([ctx[h] for h in range(H)], axis=-1).astype(jnp.bfloat16)
        proj = jnp.dot(merged, wo_ref[...], preferred_element_type=jnp.float32) + bo_ref[0]
        # TODO(synk): residual dropout omitted (inference / p = 0 semantics).
        y = srb1_ref[0].astype(jnp.float32) + proj
        o_ref[0] = _layernorm(y, g2_ref[0], be2_ref[0]).astype(o_ref.dtype)


# --------------------------------------------------------------------------------------
# Wrappers
# --------------------------------------------------------------------------------------
def prepare_params(params):
    """One-time parameter preprocessing (outside the per-forward path): fuse the K|V weights
    into one (D, 2D) matrix and pre-cast the big matrices to bf16."""
    wq, bq, wk, bk, wv, bv, wo, bo, g1, be1, g2, be2 = params
    return dict(
        wq=wq.astype(jnp.bfloat16),
        bq=bq.astype(jnp.float32),
        wkv=jnp.concatenate([wk, wv], axis=1).astype(jnp.bfloat16),   # (D, 2D)
        bkv=jnp.concatenate([bk, bv], axis=1).astype(jnp.float32),    # (1, 2D)
        wo=wo.astype(jnp.bfloat16),
        bo=bo.astype(jnp.float32),
        g1=g1.astype(jnp.float32), be1=be1.astype(jnp.float32),
        g2=g2.astype(jnp.float32), be2=be2.astype(jnp.float32),
    )


def _qkv_project(srb1, srb2, p, *, num_heads, block_m, single_buffer_consts):
    B, S, D = srb1.shape
    H = num_heads
    HD = D // H
    tm = block_m
    wbuf = 1 if single_buffer_consts else 2

    est = (2 * 2 * tm * D * 4                      # srb1/srb2 blocks (f32, double-buffered)
           + 3 * 2 * H * tm * HD * 2               # q/k/v output blocks (bf16, double-buffered)
           + wbuf * 3 * D * D * 2                  # wq + wkv (bf16)
           + 2 * tm * 3 * D * 4)                   # in-kernel f32 intermediates
    vmem_limit = min(max(int(est * 1.5), 32 * _MIB), _VMEM_CAP)

    seq_spec = pl.BlockSpec((1, tm, D), lambda b, si: (b, si, 0))
    head_spec = pl.BlockSpec((1, H, tm, HD), lambda b, si: (b, 0, si, 0))
    const = lambda r, c: _const_spec((r, c), lambda b, si: (0, 0), single_buffer_consts)
    hd_shape = jax.ShapeDtypeStruct((B, H, S, HD), jnp.bfloat16)

    return pl.pallas_call(
        functools.partial(qkv_projection_kernel, num_heads=num_heads),
        out_shape=(hd_shape, hd_shape, hd_shape),
        grid=(B, S // tm),
        in_specs=[seq_spec, seq_spec,
                  const(D, D), const(1, D),            # wq, bq
                  const(D, 2 * D), const(1, 2 * D),    # wkv, bkv
                  const(1, D), const(1, D)],           # gamma1, beta1
        out_specs=(head_spec, head_spec, head_spec),
        compiler_params=pltpu.CompilerParams(
            dimension_semantics=("parallel", "parallel"),
            vmem_limit_bytes=vmem_limit),
    )(srb1, srb2, p['wq'], p['bq'], p['wkv'], p['bkv'], p['g1'], p['be1'])


def _flash_attention(q, k, v, srb1, p, *, block_q, block_k, exp_dtype, single_buffer_consts):
    B, H, S, HD = q.shape
    D = H * HD
    tq, tk = block_q, block_k
    wbuf = 1 if single_buffer_consts else 2

    est = (2 * H * tq * HD * 2                     # q block (bf16, resident across ki)
           + 2 * 2 * H * tk * HD * 2               # k/v blocks (bf16, double-buffered)
           + 2 * tq * D * 4                        # srb1 block (f32)
           + 2 * tq * D * srb1.dtype.itemsize      # output block
           + wbuf * D * D * 2                      # wo (bf16)
           + H * tq * (HD + 2) * 4                 # acc / m / l scratch (f32)
           + H * tq * tk * 12)                     # s, p softmax intermediates
    vmem_limit = min(max(int(est * 1.5), 32 * _MIB), _VMEM_CAP)

    head_q = pl.BlockSpec((1, H, tq, HD), lambda b, qi, ki: (b, 0, qi, 0))
    head_kv = pl.BlockSpec((1, H, tk, HD), lambda b, qi, ki: (b, 0, ki, 0))
    x_spec = pl.BlockSpec((1, tq, D), lambda b, qi, ki: (b, qi, 0))
    const = lambda r, c: _const_spec((r, c), lambda b, qi, ki: (0, 0), single_buffer_consts)

    return pl.pallas_call(
        functools.partial(attention_kernel, exp_dtype=exp_dtype),
        out_shape=jax.ShapeDtypeStruct((B, S, D), srb1.dtype),
        grid=(B, S // tq, S // tk),
        in_specs=[head_q, head_kv, head_kv, x_spec,
                  const(D, D), const(1, D),            # wo, bo
                  const(1, D), const(1, D)],           # gamma2, beta2
        out_specs=x_spec,
        scratch_shapes=[
            pltpu.VMEM((H, tq, 1), jnp.float32),       # running max m
            pltpu.VMEM((H, tq, 1), jnp.float32),       # running denominator l
            pltpu.VMEM((H, tq, HD), jnp.float32),      # running numerator acc
        ],
        compiler_params=pltpu.CompilerParams(
            # B * (S // tq) parallel programs -> splits across v7x's two TensorCores.
            dimension_semantics=("parallel", "parallel", "arbitrary"),
            vmem_limit_bytes=vmem_limit),
    )(q, k, v, srb1, p['wo'], p['bo'], p['g2'], p['be2'])


def _encoder_impl(srb1, srb2, prepared, *, num_heads, block_q, block_k, exp_dtype,
                  single_buffer_consts):
    q, k, v = _qkv_project(srb1, srb2, prepared, num_heads=num_heads, block_m=block_q,
                           single_buffer_consts=single_buffer_consts)
    return _flash_attention(q, k, v, srb1, prepared, block_q=block_q, block_k=block_k,
                            exp_dtype=exp_dtype, single_buffer_consts=single_buffer_consts)


def encoder_forward(srb1, srb2, prepared, *, num_heads, block_q=None, block_k=None,
                    exp_dtype=jnp.float32):
    """EncoderLayer forward: LN1 -> MHA -> residual -> LN2 (dropouts are identity)."""
    B, S, D = srb1.shape
    assert srb2.shape == (B, S, D)
    assert D % num_heads == 0, "model dim must be divisible by the number of heads"
    tq = block_q if block_q is not None else _pick_tile(S)
    tk = block_k if block_k is not None else _pick_tile(S)
    assert S % tq == 0 and S % tk == 0

    kwargs = dict(num_heads=num_heads, block_q=tq, block_k=tk, exp_dtype=exp_dtype)
    try:
        out = _encoder_impl(srb1, srb2, prepared, single_buffer_consts=True, **kwargs)
        jax.block_until_ready(out)
        return out
    except Exception:
        # pl.Buffered(1) single-buffering not supported by this jax version -> fall back to
        # default double-buffered constant operands (identical math).
        return _encoder_impl(srb1, srb2, prepared, single_buffer_consts=False, **kwargs)


# --------------------------------------------------------------------------------------
# Pure-f32 JAX reference with the PyTorch module's semantics.
# --------------------------------------------------------------------------------------
def reference(srb1, srb2, params, *, num_heads):
    wq, bq, wk, bk, wv, bv, wo, bo, g1, be1, g2, be2 = params
    B, S, D = srb1.shape
    HD = D // num_heads

    def ln(x, g, b):
        mu = jnp.mean(x, axis=-1, keepdims=True)
        var = jnp.mean((x - mu) ** 2, axis=-1, keepdims=True)
        return (x - mu) / jnp.sqrt(var + LN_EPS) * g[0] + b[0]

    n1 = ln(srb1, g1, be1)
    n2 = ln(srb2, g1, be1)
    q = n1 @ wq + bq[0]
    k = n2 @ wk + bk[0]
    v = n2 @ wv + bv[0]
    qh = q.reshape(B, S, num_heads, HD).transpose(0, 2, 1, 3)
    kh = k.reshape(B, S, num_heads, HD).transpose(0, 2, 1, 3)
    vh = v.reshape(B, S, num_heads, HD).transpose(0, 2, 1, 3)
    scores = jnp.einsum('bhqd,bhkd->bhqk', qh, kh) / math.sqrt(HD)
    attn = jax.nn.softmax(scores, axis=-1)
    out = jnp.einsum('bhqk,bhkd->bhqd', attn, vh).transpose(0, 2, 1, 3).reshape(B, S, D)
    proj = out @ wo + bo[0]
    return ln(srb1 + proj, g2, be2)


if __name__ == "__main__":
    B, S, D, H = 2, 8, 32, 4
    key = jax.random.PRNGKey(0)
    ks = jax.random.split(key, 16)
    bound = 1.0 / math.sqrt(D)

    def lin(kw, kb):
        w = jax.random.uniform(kw, (D, D), jnp.float32, -bound, bound)   # (in, out) = W^T
        b = jax.random.uniform(kb, (1, D), jnp.float32, -bound, bound)
        return w, b

    wq, bq = lin(ks[0], ks[1])
    wk, bk = lin(ks[2], ks[3])
    wv, bv = lin(ks[4], ks[5])
    wo, bo = lin(ks[6], ks[7])
    # LayerNorm params: PyTorch default (ones/zeros) plus small deterministic jitter
    g1 = 1.0 + 0.1 * jax.random.normal(ks[8], (1, D), jnp.float32)
    be1 = 0.1 * jax.random.normal(ks[9], (1, D), jnp.float32)
    g2 = 1.0 + 0.1 * jax.random.normal(ks[10], (1, D), jnp.float32)
    be2 = 0.1 * jax.random.normal(ks[11], (1, D), jnp.float32)
    params = (wq, bq, wk, bk, wv, bv, wo, bo, g1, be1, g2, be2)

    srb1 = jax.random.normal(ks[12], (B, S, D), jnp.float32)
    srb2 = jax.random.normal(ks[13], (B, S, D), jnp.float32)

    prepared = prepare_params(params)          # one-time weight fuse + bf16 cast
    out = encoder_forward(srb1, srb2, prepared, num_heads=H)
    out = jax.block_until_ready(out)

    ref = reference(srb1, srb2, params, num_heads=H)
    assert out.shape == (B, S, D)
    max_err = float(jnp.max(jnp.abs(out - ref)))
    # bf16 MXU operands + approximate reciprocal -> loose tolerance vs the f32 reference.
    assert jnp.allclose(out, ref, atol=5e-2, rtol=5e-2), max_err
    print("KERNEL_OK")
</pallas_src>

<mosaic_0001>
module attributes {stable_mosaic.version = 11 : i64} {
  func.func @qkv_projection_kernel(%arg0: i32, %arg1: i32, %arg2: memref<1x8x32xf32, #tpu.memory_space<vmem>>, %arg3: memref<1x8x32xf32, #tpu.memory_space<vmem>>, %arg4: memref<32x32xbf16, #tpu.memory_space<vmem>>, %arg5: memref<1x32xf32, #tpu.memory_space<vmem>>, %arg6: memref<32x64xbf16, #tpu.memory_space<vmem>>, %arg7: memref<1x64xf32, #tpu.memory_space<vmem>>, %arg8: memref<1x32xf32, #tpu.memory_space<vmem>>, %arg9: memref<1x32xf32, #tpu.memory_space<vmem>>, %arg10: memref<1x4x8x8xbf16, #tpu.memory_space<vmem>>, %arg11: memref<1x4x8x8xbf16, #tpu.memory_space<vmem>>, %arg12: memref<1x4x8x8xbf16, #tpu.memory_space<vmem>>) attributes {dimension_semantics = [#tpu.dimension_semantics<parallel>, #tpu.dimension_semantics<parallel>], iteration_bounds = array<i64: 2, 1>, scalar_prefetch = 0 : i64, scratch_operands = 0 : i64, tpu.core_type = #tpu.core_type<tc>, window_params = [{transform_indices = @transform_0, window_bounds = array<i64: 1, 8, 32>}, {transform_indices = @transform_1, window_bounds = array<i64: 1, 8, 32>}, {pipeline_mode = #tpu.pipeline_mode<synchronous>, transform_indices = @transform_2, window_bounds = array<i64: 32, 32>}, {pipeline_mode = #tpu.pipeline_mode<synchronous>, transform_indices = @transform_3, window_bounds = array<i64: 1, 32>}, {pipeline_mode = #tpu.pipeline_mode<synchronous>, transform_indices = @transform_4, window_bounds = array<i64: 32, 64>}, {pipeline_mode = #tpu.pipeline_mode<synchronous>, transform_indices = @transform_5, window_bounds = array<i64: 1, 64>}, {pipeline_mode = #tpu.pipeline_mode<synchronous>, transform_indices = @transform_6, window_bounds = array<i64: 1, 32>}, {pipeline_mode = #tpu.pipeline_mode<synchronous>, transform_indices = @transform_7, window_bounds = array<i64: 1, 32>}, {transform_indices = @transform_8, window_bounds = array<i64: 1, 4, 8, 8>}, {transform_indices = @transform_9, window_bounds = array<i64: 1, 4, 8, 8>}, {transform_indices = @transform_10, window_bounds = array<i64: 1, 4, 8, 8>}]} {
    %c0 = arith.constant 0 : index
    %c0_0 = arith.constant 0 : index
    %0 = vector.load %arg8[%c0, %c0_0] : memref<1x32xf32, #tpu.memory_space<vmem>>, vector<1x32xf32>
    %1 = vector.shape_cast %0 : vector<1x32xf32> to vector<32xf32>
    %c0_1 = arith.constant 0 : index
    %c0_2 = arith.constant 0 : index
    %2 = vector.load %arg9[%c0_1, %c0_2] : memref<1x32xf32, #tpu.memory_space<vmem>>, vector<1x32xf32>
    %3 = vector.shape_cast %2 : vector<1x32xf32> to vector<32xf32>
    %c0_3 = arith.constant 0 : index
    %c0_4 = arith.constant 0 : index
    %c0_5 = arith.constant 0 : index
    %4 = vector.load %arg2[%c0_3, %c0_4, %c0_5] : memref<1x8x32xf32, #tpu.memory_space<vmem>>, vector<1x8x32xf32>
    %5 = vector.shape_cast %4 : vector<1x8x32xf32> to vector<8x32xf32>
    %cst = arith.constant dense<0.000000e+00> : vector<8xf32>
    %6 = vector.multi_reduction <add>, %5, %cst [1] : vector<8x32xf32> to vector<8xf32>
    %7 = vector.shape_cast %6 : vector<8xf32> to vector<8x1xf32>
    %cst_6 = arith.constant 3.200000e+01 : f32
    %8 = vector.broadcast %cst_6 : f32 to vector<8x1xf32>
    %9 = arith.divf %7, %8 : vector<8x1xf32>
    %10 = vector.broadcast %9 : vector<8x1xf32> to vector<8x32xf32>
    %11 = arith.subf %5, %10 : vector<8x32xf32>
    %12 = arith.mulf %11, %11 : vector<8x32xf32>
    %cst_7 = arith.constant dense<0.000000e+00> : vector<8xf32>
    %13 = vector.multi_reduction <add>, %12, %cst_7 [1] : vector<8x32xf32> to vector<8xf32>
    %14 = vector.shape_cast %13 : vector<8xf32> to vector<8x1xf32>
    %cst_8 = arith.constant 3.200000e+01 : f32
    %15 = vector.broadcast %cst_8 : f32 to vector<8x1xf32>
    %16 = arith.divf %14, %15 : vector<8x1xf32>
    %cst_9 = arith.constant 9.99999974E-6 : f32
    %17 = vector.broadcast %cst_9 : f32 to vector<8x1xf32>
    %18 = arith.addf %16, %17 : vector<8x1xf32>
    %19 = math.rsqrt %18 : vector<8x1xf32>
    %20 = vector.broadcast %19 : vector<8x1xf32> to vector<8x32xf32>
    %21 = arith.mulf %11, %20 : vector<8x32xf32>
    %22 = vector.shape_cast %1 : vector<32xf32> to vector<1x32xf32>
    %23 = vector.broadcast %22 : vector<1x32xf32> to vector<8x32xf32>
    %24 = arith.mulf %21, %23 : vector<8x32xf32>
    %25 = vector.shape_cast %3 : vector<32xf32> to vector<1x32xf32>
    %26 = vector.broadcast %25 : vector<1x32xf32> to vector<8x32xf32>
    %27 = arith.addf %24, %26 : vector<8x32xf32>
    %28 = arith.truncf %27 : vector<8x32xf32> to vector<8x32xbf16>
    %c0_10 = arith.constant 0 : index
    %c0_11 = arith.constant 0 : index
    %29 = vector.load %arg4[%c0_10, %c0_11] : memref<32x32xbf16, #tpu.memory_space<vmem>>, vector<32x32xbf16>
    %cst_12 = arith.constant dense<0.000000e+00> : vector<8x32xf32>
    %30 = tpu.matmul %28, %29, %cst_12 {dimension_numbers = #tpu.dot_dimension_numbers<[1], [0], [0], [1], [0, 0, 1, 1], [], []>} : vector<8x32xbf16>, vector<32x32xbf16>, vector<8x32xf32> -> vector<8x32xf32>
    %c0_13 = arith.constant 0 : index
    %c0_14 = arith.constant 0 : index
    %31 = vector.load %arg5[%c0_13, %c0_14] : memref<1x32xf32, #tpu.memory_space<vmem>>, vector<1x32xf32>
    %32 = vector.shape_cast %31 : vector<1x32xf32> to vector<32xf32>
    %33 = vector.shape_cast %32 : vector<32xf32> to vector<1x32xf32>
    %34 = vector.broadcast %33 : vector<1x32xf32> to vector<8x32xf32>
    %35 = arith.addf %30, %34 : vector<8x32xf32>
    %cst_15 = arith.constant 0.353553385 : f32
    %36 = vector.broadcast %cst_15 : f32 to vector<8x32xf32>
    %37 = arith.mulf %35, %36 : vector<8x32xf32>
    %38 = arith.truncf %37 : vector<8x32xf32> to vector<8x32xbf16>
    %c0_16 = arith.constant 0 : index
    %c0_17 = arith.constant 0 : index
    %c0_18 = arith.constant 0 : index
    %39 = vector.load %arg3[%c0_16, %c0_17, %c0_18] : memref<1x8x32xf32, #tpu.memory_space<vmem>>, vector<1x8x32xf32>
    %40 = vector.shape_cast %39 : vector<1x8x32xf32> to vector<8x32xf32>
    %cst_19 = arith.constant dense<0.000000e+00> : vector<8xf32>
    %41 = vector.multi_reduction <add>, %40, %cst_19 [1] : vector<8x32xf32> to vector<8xf32>
    %42 = vector.shape_cast %41 : vector<8xf32> to vector<8x1xf32>
    %cst_20 = arith.constant 3.200000e+01 : f32
    %43 = vector.broadcast %cst_20 : f32 to vector<8x1xf32>
    %44 = arith.divf %42, %43 : vector<8x1xf32>
    %45 = vector.broadcast %44 : vector<8x1xf32> to vector<8x32xf32>
    %46 = arith.subf %40, %45 : vector<8x32xf32>
    %47 = arith.mulf %46, %46 : vector<8x32xf32>
    %cst_21 = arith.constant dense<0.000000e+00> : vector<8xf32>
    %48 = vector.multi_reduction <add>, %47, %cst_21 [1] : vector<8x32xf32> to vector<8xf32>
    %49 = vector.shape_cast %48 : vector<8xf32> to vector<8x1xf32>
    %cst_22 = arith.constant 3.200000e+01 : f32
    %50 = vector.broadcast %cst_22 : f32 to vector<8x1xf32>
    %51 = arith.divf %49, %50 : vector<8x1xf32>
    %cst_23 = arith.constant 9.99999974E-6 : f32
    %52 = vector.broadcast %cst_23 : f32 to vector<8x1xf32>
    %53 = arith.addf %51, %52 : vector<8x1xf32>
    %54 = math.rsqrt %53 : vector<8x1xf32>
    %55 = vector.broadcast %54 : vector<8x1xf32> to vector<8x32xf32>
    %56 = arith.mulf %46, %55 : vector<8x32xf32>
    %57 = vector.shape_cast %1 : vector<32xf32> to vector<1x32xf32>
    %58 = vector.broadcast %57 : vector<1x32xf32> to vector<8x32xf32>
    %59 = arith.mulf %56, %58 : vector<8x32xf32>
    %60 = vector.shape_cast %3 : vector<32xf32> to vector<1x32xf32>
    %61 = vector.broadcast %60 : vector<1x32xf32> to vector<8x32xf32>
    %62 = arith.addf %59, %61 : vector<8x32xf32>
    %63 = arith.truncf %62 : vector<8x32xf32> to vector<8x32xbf16>
    %c0_24 = arith.constant 0 : index
    %c0_25 = arith.constant 0 : index
    %64 = vector.load %arg6[%c0_24, %c0_25] : memref<32x64xbf16, #tpu.memory_space<vmem>>, vector<32x64xbf16>
    %cst_26 = arith.constant dense<0.000000e+00> : vector<8x64xf32>
    %65 = tpu.matmul %63, %64, %cst_26 {dimension_numbers = #tpu.dot_dimension_numbers<[1], [0], [0], [1], [0, 0, 1, 1], [], []>} : vector<8x32xbf16>, vector<32x64xbf16>, vector<8x64xf32> -> vector<8x64xf32>
    %c0_27 = arith.constant 0 : index
    %c0_28 = arith.constant 0 : index
    %66 = vector.load %arg7[%c0_27, %c0_28] : memref<1x64xf32, #tpu.memory_space<vmem>>, vector<1x64xf32>
    %67 = vector.shape_cast %66 : vector<1x64xf32> to vector<64xf32>
    %68 = vector.shape_cast %67 : vector<64xf32> to vector<1x64xf32>
    %69 = vector.broadcast %68 : vector<1x64xf32> to vector<8x64xf32>
    %70 = arith.addf %65, %69 : vector<8x64xf32>
    %71 = arith.truncf %70 : vector<8x64xf32> to vector<8x64xbf16>
    %72 = vector.extract_strided_slice %38 {offsets = [0, 0], sizes = [8, 8], strides = [1, 1]} : vector<8x32xbf16> to vector<8x8xbf16>
    %c0_29 = arith.constant 0 : index
    %c0_30 = arith.constant 0 : index
    %c0_31 = arith.constant 0 : index
    %c0_32 = arith.constant 0 : index
    %73 = vector.load %arg10[%c0_29, %c0_30, %c0_31, %c0_32] : memref<1x4x8x8xbf16, #tpu.memory_space<vmem>>, vector<1x1x8x8xbf16>
    %74 = vector.shape_cast %73 : vector<1x1x8x8xbf16> to vector<8x8xbf16>
    %75 = vector.shape_cast %72 : vector<8x8xbf16> to vector<1x1x8x8xbf16>
    tpu.vector_store %arg10[%c0_29, %c0_30, %c0_31, %c0_32], %75 {strides = array<i32>} : memref<1x4x8x8xbf16, #tpu.memory_space<vmem>>, vector<1x1x8x8xbf16>,
    %76 = vector.extract_strided_slice %71 {offsets = [0, 0], sizes = [8, 8], strides = [1, 1]} : vector<8x64xbf16> to vector<8x8xbf16>
    %c0_33 = arith.constant 0 : index
    %c0_34 = arith.constant 0 : index
    %c0_35 = arith.constant 0 : index
    %c0_36 = arith.constant 0 : index
    %77 = vector.load %arg11[%c0_33, %c0_34, %c0_35, %c0_36] : memref<1x4x8x8xbf16, #tpu.memory_space<vmem>>, vector<1x1x8x8xbf16>
    %78 = vector.shape_cast %77 : vector<1x1x8x8xbf16> to vector<8x8xbf16>
    %79 = vector.shape_cast %76 : vector<8x8xbf16> to vector<1x1x8x8xbf16>
    tpu.vector_store %arg11[%c0_33, %c0_34, %c0_35, %c0_36], %79 {strides = array<i32>} : memref<1x4x8x8xbf16, #tpu.memory_space<vmem>>, vector<1x1x8x8xbf16>,
    %80 = vector.extract_strided_slice %71 {offsets = [0, 32], sizes = [8, 8], strides = [1, 1]} : vector<8x64xbf16> to vector<8x8xbf16>
    %c0_37 = arith.constant 0 : index
    %c0_38 = arith.constant 0 : index
    %c0_39 = arith.constant 0 : index
    %c0_40 = arith.constant 0 : index
    %81 = vector.load %arg12[%c0_37, %c0_38, %c0_39, %c0_40] : memref<1x4x8x8xbf16, #tpu.memory_space<vmem>>, vector<1x1x8x8xbf16>
    %82 = vector.shape_cast %81 : vector<1x1x8x8xbf16> to vector<8x8xbf16>
    %83 = vector.shape_cast %80 : vector<8x8xbf16> to vector<1x1x8x8xbf16>
    tpu.vector_store %arg12[%c0_37, %c0_38, %c0_39, %c0_40], %83 {strides = array<i32>} : memref<1x4x8x8xbf16, #tpu.memory_space<vmem>>, vector<1x1x8x8xbf16>,
    %84 = vector.extract_strided_slice %38 {offsets = [0, 8], sizes = [8, 8], strides = [1, 1]} : vector<8x32xbf16> to vector<8x8xbf16>
    %c0_41 = arith.constant 0 : index
    %c1 = arith.constant 1 : index
    %c0_42 = arith.constant 0 : index
    %c0_43 = arith.constant 0 : index
    %85 = vector.load %arg10[%c0_41, %c1, %c0_42, %c0_43] : memref<1x4x8x8xbf16, #tpu.memory_space<vmem>>, vector<1x1x8x8xbf16>
    %86 = vector.shape_cast %85 : vector<1x1x8x8xbf16> to vector<8x8xbf16>
    %87 = vector.shape_cast %84 : vector<8x8xbf16> to vector<1x1x8x8xbf16>
    tpu.vector_store %arg10[%c0_41, %c1, %c0_42, %c0_43], %87 {strides = array<i32>} : memref<1x4x8x8xbf16, #tpu.memory_space<vmem>>, vector<1x1x8x8xbf16>,
    %88 = vector.extract_strided_slice %71 {offsets = [0, 8], sizes = [8, 8], strides = [1, 1]} : vector<8x64xbf16> to vector<8x8xbf16>
    %c0_44 = arith.constant 0 : index
    %c1_45 = arith.constant 1 : index
    %c0_46 = arith.constant 0 : index
    %c0_47 = arith.constant 0 : index
    %89 = vector.load %arg11[%c0_44, %c1_45, %c0_46, %c0_47] : memref<1x4x8x8xbf16, #tpu.memory_space<vmem>>, vector<1x1x8x8xbf16>
    %90 = vector.shape_cast %89 : vector<1x1x8x8xbf16> to vector<8x8xbf16>
    %91 = vector.shape_cast %88 : vector<8x8xbf16> to vector<1x1x8x8xbf16>
    tpu.vector_store %arg11[%c0_44, %c1_45, %c0_46, %c0_47], %91 {strides = array<i32>} : memref<1x4x8x8xbf16, #tpu.memory_space<vmem>>, vector<1x1x8x8xbf16>,
    %92 = vector.extract_strided_slice %71 {offsets = [0, 40], sizes = [8, 8], strides = [1, 1]} : vector<8x64xbf16> to vector<8x8xbf16>
    %c0_48 = arith.constant 0 : index
    %c1_49 = arith.constant 1 : index
    %c0_50 = arith.constant 0 : index
    %c0_51 = arith.constant 0 : index
    %93 = vector.load %arg12[%c0_48, %c1_49, %c0_50, %c0_51] : memref<1x4x8x8xbf16, #tpu.memory_space<vmem>>, vector<1x1x8x8xbf16>
    %94 = vector.shape_cast %93 : vector<1x1x8x8xbf16> to vector<8x8xbf16>
    %95 = vector.shape_cast %92 : vector<8x8xbf16> to vector<1x1x8x8xbf16>
    tpu.vector_store %arg12[%c0_48, %c1_49, %c0_50, %c0_51], %95 {strides = array<i32>} : memref<1x4x8x8xbf16, #tpu.memory_space<vmem>>, vector<1x1x8x8xbf16>,
    %96 = vector.extract_strided_slice %38 {offsets = [0, 16], sizes = [8, 8], strides = [1, 1]} : vector<8x32xbf16> to vector<8x8xbf16>
    %c0_52 = arith.constant 0 : index
    %c2 = arith.constant 2 : index
    %c0_53 = arith.constant 0 : index
    %c0_54 = arith.constant 0 : index
    %97 = vector.load %arg10[%c0_52, %c2, %c0_53, %c0_54] : memref<1x4x8x8xbf16, #tpu.memory_space<vmem>>, vector<1x1x8x8xbf16>
    %98 = vector.shape_cast %97 : vector<1x1x8x8xbf16> to vector<8x8xbf16>
    %99 = vector.shape_cast %96 : vector<8x8xbf16> to vector<1x1x8x8xbf16>
    tpu.vector_store %arg10[%c0_52, %c2, %c0_53, %c0_54], %99 {strides = array<i32>} : memref<1x4x8x8xbf16, #tpu.memory_space<vmem>>, vector<1x1x8x8xbf16>,
    %100 = vector.extract_strided_slice %71 {offsets = [0, 16], sizes = [8, 8], strides = [1, 1]} : vector<8x64xbf16> to vector<8x8xbf16>
    %c0_55 = arith.constant 0 : index
    %c2_56 = arith.constant 2 : index
    %c0_57 = arith.constant 0 : index
    %c0_58 = arith.constant 0 : index
    %101 = vector.load %arg11[%c0_55, %c2_56, %c0_57, %c0_58] : memref<1x4x8x8xbf16, #tpu.memory_space<vmem>>, vector<1x1x8x8xbf16>
    %102 = vector.shape_cast %101 : vector<1x1x8x8xbf16> to vector<8x8xbf16>
    %103 = vector.shape_cast %100 : vector<8x8xbf16> to vector<1x1x8x8xbf16>
    tpu.vector_store %arg11[%c0_55, %c2_56, %c0_57, %c0_58], %103 {strides = array<i32>} : memref<1x4x8x8xbf16, #tpu.memory_space<vmem>>, vector<1x1x8x8xbf16>,
    %104 = vector.extract_strided_slice %71 {offsets = [0, 48], sizes = [8, 8], strides = [1, 1]} : vector<8x64xbf16> to vector<8x8xbf16>
    %c0_59 = arith.constant 0 : index
    %c2_60 = arith.constant 2 : index
    %c0_61 = arith.constant 0 : index
    %c0_62 = arith.constant 0 : index
    %105 = vector.load %arg12[%c0_59, %c2_60, %c0_61, %c0_62] : memref<1x4x8x8xbf16, #tpu.memory_space<vmem>>, vector<1x1x8x8xbf16>
    %106 = vector.shape_cast %105 : vector<1x1x8x8xbf16> to vector<8x8xbf16>
    %107 = vector.shape_cast %104 : vector<8x8xbf16> to vector<1x1x8x8xbf16>
    tpu.vector_store %arg12[%c0_59, %c2_60, %c0_61, %c0_62], %107 {strides = array<i32>} : memref<1x4x8x8xbf16, #tpu.memory_space<vmem>>, vector<1x1x8x8xbf16>,
    %108 = vector.extract_strided_slice %38 {offsets = [0, 24], sizes = [8, 8], strides = [1, 1]} : vector<8x32xbf16> to vector<8x8xbf16>
    %c0_63 = arith.constant 0 : index
    %c3 = arith.constant 3 : index
    %c0_64 = arith.constant 0 : index
    %c0_65 = arith.constant 0 : index
    %109 = vector.load %arg10[%c0_63, %c3, %c0_64, %c0_65] : memref<1x4x8x8xbf16, #tpu.memory_space<vmem>>, vector<1x1x8x8xbf16>
    %110 = vector.shape_cast %109 : vector<1x1x8x8xbf16> to vector<8x8xbf16>
    %111 = vector.shape_cast %108 : vector<8x8xbf16> to vector<1x1x8x8xbf16>
    tpu.vector_store %arg10[%c0_63, %c3, %c0_64, %c0_65], %111 {strides = array<i32>} : memref<1x4x8x8xbf16, #tpu.memory_space<vmem>>, vector<1x1x8x8xbf16>,
    %112 = vector.extract_strided_slice %71 {offsets = [0, 24], sizes = [8, 8], strides = [1, 1]} : vector<8x64xbf16> to vector<8x8xbf16>
    %c0_66 = arith.constant 0 : index
    %c3_67 = arith.constant 3 : index
    %c0_68 = arith.constant 0 : index
    %c0_69 = arith.constant 0 : index
    %113 = vector.load %arg11[%c0_66, %c3_67, %c0_68, %c0_69] : memref<1x4x8x8xbf16, #tpu.memory_space<vmem>>, vector<1x1x8x8xbf16>
    %114 = vector.shape_cast %113 : vector<1x1x8x8xbf16> to vector<8x8xbf16>
    %115 = vector.shape_cast %112 : vector<8x8xbf16> to vector<1x1x8x8xbf16>
    tpu.vector_store %arg11[%c0_66, %c3_67, %c0_68, %c0_69], %115 {strides = array<i32>} : memref<1x4x8x8xbf16, #tpu.memory_space<vmem>>, vector<1x1x8x8xbf16>,
    %116 = vector.extract_strided_slice %71 {offsets = [0, 56], sizes = [8, 8], strides = [1, 1]} : vector<8x64xbf16> to vector<8x8xbf16>
    %c0_70 = arith.constant 0 : index
    %c3_71 = arith.constant 3 : index
    %c0_72 = arith.constant 0 : index
    %c0_73 = arith.constant 0 : index
    %117 = vector.load %arg12[%c0_70, %c3_71, %c0_72, %c0_73] : memref<1x4x8x8xbf16, #tpu.memory_space<vmem>>, vector<1x1x8x8xbf16>
    %118 = vector.shape_cast %117 : vector<1x1x8x8xbf16> to vector<8x8xbf16>
    %119 = vector.shape_cast %116 : vector<8x8xbf16> to vector<1x1x8x8xbf16>
    tpu.vector_store %arg12[%c0_70, %c3_71, %c0_72, %c0_73], %119 {strides = array<i32>} : memref<1x4x8x8xbf16, #tpu.memory_space<vmem>>, vector<1x1x8x8xbf16>,
    return
  }
  func.func @transform_0(%arg0: i32, %arg1: i32) -> (i32, i32, i32) {
    %c0_i32 = arith.constant 0 : i32
    %c0_i32_0 = arith.constant 0 : i32
    return %arg0, %arg1, %c0_i32 : i32, i32, i32
  }
  func.func @transform_1(%arg0: i32, %arg1: i32) -> (i32, i32, i32) {
    %c0_i32 = arith.constant 0 : i32
    %c0_i32_0 = arith.constant 0 : i32
    return %arg0, %arg1, %c0_i32 : i32, i32, i32
  }
  func.func @transform_2(%arg0: i32, %arg1: i32) -> (i32, i32) {
    %c0_i32 = arith.constant 0 : i32
    %c0_i32_0 = arith.constant 0 : i32
    %c0_i32_1 = arith.constant 0 : i32
    return %c0_i32, %c0_i32_0 : i32, i32
  }
  func.func @transform_3(%arg0: i32, %arg1: i32) -> (i32, i32) {
    %c0_i32 = arith.constant 0 : i32
    %c0_i32_0 = arith.constant 0 : i32
    %c0_i32_1 = arith.constant 0 : i32
    return %c0_i32, %c0_i32_0 : i32, i32
  }
  func.func @transform_4(%arg0: i32, %arg1: i32) -> (i32, i32) {
    %c0_i32 = arith.constant 0 : i32
    %c0_i32_0 = arith.constant 0 : i32
    %c0_i32_1 = arith.constant 0 : i32
    return %c0_i32, %c0_i32_0 : i32, i32
  }
  func.func @transform_5(%arg0: i32, %arg1: i32) -> (i32, i32) {
    %c0_i32 = arith.constant 0 : i32
    %c0_i32_0 = arith.constant 0 : i32
    %c0_i32_1 = arith.constant 0 : i32
    return %c0_i32, %c0_i32_0 : i32, i32
  }
  func.func @transform_6(%arg0: i32, %arg1: i32) -> (i32, i32) {
    %c0_i32 = arith.constant 0 : i32
    %c0_i32_0 = arith.constant 0 : i32
    %c0_i32_1 = arith.constant 0 : i32
    return %c0_i32, %c0_i32_0 : i32, i32
  }
  func.func @transform_7(%arg0: i32, %arg1: i32) -> (i32, i32) {
    %c0_i32 = arith.constant 0 : i32
    %c0_i32_0 = arith.constant 0 : i32
    %c0_i32_1 = arith.constant 0 : i32
    return %c0_i32, %c0_i32_0 : i32, i32
  }
  func.func @transform_8(%arg0: i32, %arg1: i32) -> (i32, i32, i32, i32) {
    %c0_i32 = arith.constant 0 : i32
    %c0_i32_0 = arith.constant 0 : i32
    %c0_i32_1 = arith.constant 0 : i32
    return %arg0, %c0_i32, %arg1, %c0_i32_0 : i32, i32, i32, i32
  }
  func.func @transform_9(%arg0: i32, %arg1: i32) -> (i32, i32, i32, i32) {
    %c0_i32 = arith.constant 0 : i32
    %c0_i32_0 = arith.constant 0 : i32
    %c0_i32_1 = arith.constant 0 : i32
    return %arg0, %c0_i32, %arg1, %c0_i32_0 : i32, i32, i32, i32
  }
  func.func @transform_10(%arg0: i32, %arg1: i32) -> (i32, i32, i32, i32) {
    %c0_i32 = arith.constant 0 : i32
    %c0_i32_0 = arith.constant 0 : i32
    %c0_i32_1 = arith.constant 0 : i32
    return %arg0, %c0_i32, %arg1, %c0_i32_0 : i32, i32, i32, i32
  }
}

module attributes {stable_mosaic.version = 11 : i64} {
  func.func @qkv_projection_kernel(%arg0: i32, %arg1: i32, %arg2: memref<1x8x32xf32, #tpu.memory_space<vmem>>, %arg3: memref<1x8x32xf32, #tpu.memory_space<vmem>>, %arg4: memref<32x32xbf16, #tpu.memory_space<vmem>>, %arg5: memref<1x32xf32, #tpu.memory_space<vmem>>, %arg6: memref<32x64xbf16, #tpu.memory_space<vmem>>, %arg7: memref<1x64xf32, #tpu.memory_space<vmem>>, %arg8: memref<1x32xf32, #tpu.memory_space<vmem>>, %arg9: memref<1x32xf32, #tpu.memory_space<vmem>>, %arg10: memref<1x4x8x8xbf16, #tpu.memory_space<vmem>>, %arg11: memref<1x4x8x8xbf16, #tpu.memory_space<vmem>>, %arg12: memref<1x4x8x8xbf16, #tpu.memory_space<vmem>>) attributes {dimension_semantics = [#tpu.dimension_semantics<parallel>, #tpu.dimension_semantics<parallel>], iteration_bounds = array<i64: 2, 1>, scalar_prefetch = 0 : i64, scratch_operands = 0 : i64, tpu.core_type = #tpu.core_type<tc>, window_params = [{transform_indices = @transform_0, window_bounds = array<i64: 1, 8, 32>}, {transform_indices = @transform_1, window_bounds = array<i64: 1, 8, 32>}, {pipeline_mode = #tpu.pipeline_mode<synchronous>, transform_indices = @transform_2, window_bounds = array<i64: 32, 32>}, {pipeline_mode = #tpu.pipeline_mode<synchronous>, transform_indices = @transform_3, window_bounds = array<i64: 1, 32>}, {pipeline_mode = #tpu.pipeline_mode<synchronous>, transform_indices = @transform_4, window_bounds = array<i64: 32, 64>}, {pipeline_mode = #tpu.pipeline_mode<synchronous>, transform_indices = @transform_5, window_bounds = array<i64: 1, 64>}, {pipeline_mode = #tpu.pipeline_mode<synchronous>, transform_indices = @transform_6, window_bounds = array<i64: 1, 32>}, {pipeline_mode = #tpu.pipeline_mode<synchronous>, transform_indices = @transform_7, window_bounds = array<i64: 1, 32>}, {transform_indices = @transform_8, window_bounds = array<i64: 1, 4, 8, 8>}, {transform_indices = @transform_9, window_bounds = array<i64: 1, 4, 8, 8>}, {transform_indices = @transform_10, window_bounds = array<i64: 1, 4, 8, 8>}]} {
    %c0 = arith.constant 0 : index
    %c0_0 = arith.constant 0 : index
    %0 = vector.load %arg8[%c0, %c0_0] : memref<1x32xf32, #tpu.memory_space<vmem>>, vector<1x32xf32>
    %1 = vector.shape_cast %0 : vector<1x32xf32> to vector<32xf32>
    %c0_1 = arith.constant 0 : index
    %c0_2 = arith.constant 0 : index
    %2 = vector.load %arg9[%c0_1, %c0_2] : memref<1x32xf32, #tpu.memory_space<vmem>>, vector<1x32xf32>
    %3 = vector.shape_cast %2 : vector<1x32xf32> to vector<32xf32>
    %c0_3 = arith.constant 0 : index
    %c0_4 = arith.constant 0 : index
    %c0_5 = arith.constant 0 : index
    %4 = vector.load %arg2[%c0_3, %c0_4, %c0_5] : memref<1x8x32xf32, #tpu.memory_space<vmem>>, vector<1x8x32xf32>
    %5 = vector.shape_cast %4 : vector<1x8x32xf32> to vector<8x32xf32>
    %cst = arith.constant dense<0.000000e+00> : vector<8xf32>
    %6 = vector.multi_reduction <add>, %5, %cst [1] : vector<8x32xf32> to vector<8xf32>
    %7 = vector.shape_cast %6 : vector<8xf32> to vector<8x1xf32>
    %cst_6 = arith.constant 3.200000e+01 : f32
    %8 = vector.broadcast %cst_6 : f32 to vector<8x1xf32>
    %9 = arith.divf %7, %8 : vector<8x1xf32>
    %10 = vector.broadcast %9 : vector<8x1xf32> to vector<8x32xf32>
    %11 = arith.subf %5, %10 : vector<8x32xf32>
    %12 = arith.mulf %11, %11 : vector<8x32xf32>
    %cst_7 = arith.constant dense<0.000000e+00> : vector<8xf32>
    %13 = vector.multi_reduction <add>, %12, %cst_7 [1] : vector<8x32xf32> to vector<8xf32>
    %14 = vector.shape_cast %13 : vector<8xf32> to vector<8x1xf32>
    %cst_8 = arith.constant 3.200000e+01 : f32
    %15 = vector.broadcast %cst_8 : f32 to vector<8x1xf32>
    %16 = arith.divf %14, %15 : vector<8x1xf32>
    %cst_9 = arith.constant 9.99999974E-6 : f32
    %17 = vector.broadcast %cst_9 : f32 to vector<8x1xf32>
    %18 = arith.addf %16, %17 : vector<8x1xf32>
    %19 = math.rsqrt %18 : vector<8x1xf32>
    %20 = vector.broadcast %19 : vector<8x1xf32> to vector<8x32xf32>
    %21 = arith.mulf %11, %20 : vector<8x32xf32>
    %22 = vector.shape_cast %1 : vector<32xf32> to vector<1x32xf32>
    %23 = vector.broadcast %22 : vector<1x32xf32> to vector<8x32xf32>
    %24 = arith.mulf %21, %23 : vector<8x32xf32>
    %25 = vector.shape_cast %3 : vector<32xf32> to vector<1x32xf32>
    %26 = vector.broadcast %25 : vector<1x32xf32> to vector<8x32xf32>
    %27 = arith.addf %24, %26 : vector<8x32xf32>
    %28 = arith.truncf %27 : vector<8x32xf32> to vector<8x32xbf16>
    %c0_10 = arith.constant 0 : index
    %c0_11 = arith.constant 0 : index
    %29 = vector.load %arg4[%c0_10, %c0_11] : memref<32x32xbf16, #tpu.memory_space<vmem>>, vector<32x32xbf16>
    %cst_12 = arith.constant dense<0.000000e+00> : vector<8x32xf32>
    %30 = tpu.matmul %28, %29, %cst_12 {dimension_numbers = #tpu.dot_dimension_numbers<[1], [0], [0], [1], [0, 0, 1, 1], [], []>} : vector<8x32xbf16>, vector<32x32xbf16>, vector<8x32xf32> -> vector<8x32xf32>
    %c0_13 = arith.constant 0 : index
    %c0_14 = arith.constant 0 : index
    %31 = vector.load %arg5[%c0_13, %c0_14] : memref<1x32xf32, #tpu.memory_space<vmem>>, vector<1x32xf32>
    %32 = vector.shape_cast %31 : vector<1x32xf32> to vector<32xf32>
    %33 = vector.shape_cast %32 : vector<32xf32> to vector<1x32xf32>
    %34 = vector.broadcast %33 : vector<1x32xf32> to vector<8x32xf32>
    %35 = arith.addf %30, %34 : vector<8x32xf32>
    %cst_15 = arith.constant 0.353553385 : f32
    %36 = vector.broadcast %cst_15 : f32 to vector<8x32xf32>
    %37 = arith.mulf %35, %36 : vector<8x32xf32>
    %38 = arith.truncf %37 : vector<8x32xf32> to vector<8x32xbf16>
    %c0_16 = arith.constant 0 : index
    %c0_17 = arith.constant 0 : index
    %c0_18 = arith.constant 0 : index
    %39 = vector.load %arg3[%c0_16, %c0_17, %c0_18] : memref<1x8x32xf32, #tpu.memory_space<vmem>>, vector<1x8x32xf32>
    %40 = vector.shape_cast %39 : vector<1x8x32xf32> to vector<8x32xf32>
    %cst_19 = arith.constant dense<0.000000e+00> : vector<8xf32>
    %41 = vector.multi_reduction <add>, %40, %cst_19 [1] : vector<8x32xf32> to vector<8xf32>
    %42 = vector.shape_cast %41 : vector<8xf32> to vector<8x1xf32>
    %cst_20 = arith.constant 3.200000e+01 : f32
    %43 = vector.broadcast %cst_20 : f32 to vector<8x1xf32>
    %44 = arith.divf %42, %43 : vector<8x1xf32>
    %45 = vector.broadcast %44 : vector<8x1xf32> to vector<8x32xf32>
    %46 = arith.subf %40, %45 : vector<8x32xf32>
    %47 = arith.mulf %46, %46 : vector<8x32xf32>
    %cst_21 = arith.constant dense<0.000000e+00> : vector<8xf32>
    %48 = vector.multi_reduction <add>, %47, %cst_21 [1] : vector<8x32xf32> to vector<8xf32>
    %49 = vector.shape_cast %48 : vector<8xf32> to vector<8x1xf32>
    %cst_22 = arith.constant 3.200000e+01 : f32
    %50 = vector.broadcast %cst_22 : f32 to vector<8x1xf32>
    %51 = arith.divf %49, %50 : vector<8x1xf32>
    %cst_23 = arith.constant 9.99999974E-6 : f32
    %52 = vector.broadcast %cst_23 : f32 to vector<8x1xf32>
    %53 = arith.addf %51, %52 : vector<8x1xf32>
    %54 = math.rsqrt %53 : vector<8x1xf32>
    %55 = vector.broadcast %54 : vector<8x1xf32> to vector<8x32xf32>
    %56 = arith.mulf %46, %55 : vector<8x32xf32>
    %57 = vector.shape_cast %1 : vector<32xf32> to vector<1x32xf32>
    %58 = vector.broadcast %57 : vector<1x32xf32> to vector<8x32xf32>
    %59 = arith.mulf %56, %58 : vector<8x32xf32>
    %60 = vector.shape_cast %3 : vector<32xf32> to vector<1x32xf32>
    %61 = vector.broadcast %60 : vector<1x32xf32> to vector<8x32xf32>
    %62 = arith.addf %59, %61 : vector<8x32xf32>
    %63 = arith.truncf %62 : vector<8x32xf32> to vector<8x32xbf16>
    %c0_24 = arith.constant 0 : index
    %c0_25 = arith.constant 0 : index
    %64 = vector.load %arg6[%c0_24, %c0_25] : memref<32x64xbf16, #tpu.memory_space<vmem>>, vector<32x64xbf16>
    %cst_26 = arith.constant dense<0.000000e+00> : vector<8x64xf32>
    %65 = tpu.matmul %63, %64, %cst_26 {dimension_numbers = #tpu.dot_dimension_numbers<[1], [0], [0], [1], [0, 0, 1, 1], [], []>} : vector<8x32xbf16>, vector<32x64xbf16>, vector<8x64xf32> -> vector<8x64xf32>
    %c0_27 = arith.constant 0 : index
    %c0_28 = arith.constant 0 : index
    %66 = vector.load %arg7[%c0_27, %c0_28] : memref<1x64xf32, #tpu.memory_space<vmem>>, vector<1x64xf32>
    %67 = vector.shape_cast %66 : vector<1x64xf32> to vector<64xf32>
    %68 = vector.shape_cast %67 : vector<64xf32> to vector<1x64xf32>
    %69 = vector.broadcast %68 : vector<1x64xf32> to vector<8x64xf32>
    %70 = arith.addf %65, %69 : vector<8x64xf32>
    %71 = arith.truncf %70 : vector<8x64xf32> to vector<8x64xbf16>
    %72 = vector.extract_strided_slice %38 {offsets = [0, 0], sizes = [8, 8], strides = [1, 1]} : vector<8x32xbf16> to vector<8x8xbf16>
    %c0_29 = arith.constant 0 : index
    %c0_30 = arith.constant 0 : index
    %c0_31 = arith.constant 0 : index
    %c0_32 = arith.constant 0 : index
    %73 = vector.load %arg10[%c0_29, %c0_30, %c0_31, %c0_32] : memref<1x4x8x8xbf16, #tpu.memory_space<vmem>>, vector<1x1x8x8xbf16>
    %74 = vector.shape_cast %73 : vector<1x1x8x8xbf16> to vector<8x8xbf16>
    %75 = vector.shape_cast %72 : vector<8x8xbf16> to vector<1x1x8x8xbf16>
    tpu.vector_store %arg10[%c0_29, %c0_30, %c0_31, %c0_32], %75 {strides = array<i32>} : memref<1x4x8x8xbf16, #tpu.memory_space<vmem>>, vector<1x1x8x8xbf16>,
    %76 = vector.extract_strided_slice %71 {offsets = [0, 0], sizes = [8, 8], strides = [1, 1]} : vector<8x64xbf16> to vector<8x8xbf16>
    %c0_33 = arith.constant 0 : index
    %c0_34 = arith.constant 0 : index
    %c0_35 = arith.constant 0 : index
    %c0_36 = arith.constant 0 : index
    %77 = vector.load %arg11[%c0_33, %c0_34, %c0_35, %c0_36] : memref<1x4x8x8xbf16, #tpu.memory_space<vmem>>, vector<1x1x8x8xbf16>
    %78 = vector.shape_cast %77 : vector<1x1x8x8xbf16> to vector<8x8xbf16>
    %79 = vector.shape_cast %76 : vector<8x8xbf16> to vector<1x1x8x8xbf16>
    tpu.vector_store %arg11[%c0_33, %c0_34, %c0_35, %c0_36], %79 {strides = array<i32>} : memref<1x4x8x8xbf16, #tpu.memory_space<vmem>>, vector<1x1x8x8xbf16>,
    %80 = vector.extract_strided_slice %71 {offsets = [0, 32], sizes = [8, 8], strides = [1, 1]} : vector<8x64xbf16> to vector<8x8xbf16>
    %c0_37 = arith.constant 0 : index
    %c0_38 = arith.constant 0 : index
    %c0_39 = arith.constant 0 : index
    %c0_40 = arith.constant 0 : index
    %81 = vector.load %arg12[%c0_37, %c0_38, %c0_39, %c0_40] : memref<1x4x8x8xbf16, #tpu.memory_space<vmem>>, vector<1x1x8x8xbf16>
    %82 = vector.shape_cast %81 : vector<1x1x8x8xbf16> to vector<8x8xbf16>
    %83 = vector.shape_cast %80 : vector<8x8xbf16> to vector<1x1x8x8xbf16>
    tpu.vector_store %arg12[%c0_37, %c0_38, %c0_39, %c0_40], %83 {strides = array<i32>} : memref<1x4x8x8xbf16, #tpu.memory_space<vmem>>, vector<1x1x8x8xbf16>,
    %84 = vector.extract_strided_slice %38 {offsets = [0, 8], sizes = [8, 8], strides = [1, 1]} : vector<8x32xbf16> to vector<8x8xbf16>
    %c0_41 = arith.constant 0 : index
    %c1 = arith.constant 1 : index
    %c0_42 = arith.constant 0 : index
    %c0_43 = arith.constant 0 : index
    %85 = vector.load %arg10[%c0_41, %c1, %c0_42, %c0_43] : memref<1x4x8x8xbf16, #tpu.memory_space<vmem>>, vector<1x1x8x8xbf16>
    %86 = vector.shape_cast %85 : vector<1x1x8x8xbf16> to vector<8x8xbf16>
    %87 = vector.shape_cast %84 : vector<8x8xbf16> to vector<1x1x8x8xbf16>
    tpu.vector_store %arg10[%c0_41, %c1, %c0_42, %c0_43], %87 {strides = array<i32>} : memref<1x4x8x8xbf16, #tpu.memory_space<vmem>>, vector<1x1x8x8xbf16>,
    %88 = vector.extract_strided_slice %71 {offsets = [0, 8], sizes = [8, 8], strides = [1, 1]} : vector<8x64xbf16> to vector<8x8xbf16>
    %c0_44 = arith.constant 0 : index
    %c1_45 = arith.constant 1 : index
    %c0_46 = arith.constant 0 : index
    %c0_47 = arith.constant 0 : index
    %89 = vector.load %arg11[%c0_44, %c1_45, %c0_46, %c0_47] : memref<1x4x8x8xbf16, #tpu.memory_space<vmem>>, vector<1x1x8x8xbf16>
    %90 = vector.shape_cast %89 : vector<1x1x8x8xbf16> to vector<8x8xbf16>
    %91 = vector.shape_cast %88 : vector<8x8xbf16> to vector<1x1x8x8xbf16>
    tpu.vector_store %arg11[%c0_44, %c1_45, %c0_46, %c0_47], %91 {strides = array<i32>} : memref<1x4x8x8xbf16, #tpu.memory_space<vmem>>, vector<1x1x8x8xbf16>,
    %92 = vector.extract_strided_slice %71 {offsets = [0, 40], sizes = [8, 8], strides = [1, 1]} : vector<8x64xbf16> to vector<8x8xbf16>
    %c0_48 = arith.constant 0 : index
    %c1_49 = arith.constant 1 : index
    %c0_50 = arith.constant 0 : index
    %c0_51 = arith.constant 0 : index
    %93 = vector.load %arg12[%c0_48, %c1_49, %c0_50, %c0_51] : memref<1x4x8x8xbf16, #tpu.memory_space<vmem>>, vector<1x1x8x8xbf16>
    %94 = vector.shape_cast %93 : vector<1x1x8x8xbf16> to vector<8x8xbf16>
    %95 = vector.shape_cast %92 : vector<8x8xbf16> to vector<1x1x8x8xbf16>
    tpu.vector_store %arg12[%c0_48, %c1_49, %c0_50, %c0_51], %95 {strides = array<i32>} : memref<1x4x8x8xbf16, #tpu.memory_space<vmem>>, vector<1x1x8x8xbf16>,
    %96 = vector.extract_strided_slice %38 {offsets = [0, 16], sizes = [8, 8], strides = [1, 1]} : vector<8x32xbf16> to vector<8x8xbf16>
    %c0_52 = arith.constant 0 : index
    %c2 = arith.constant 2 : index
    %c0_53 = arith.constant 0 : index
    %c0_54 = arith.constant 0 : index
    %97 = vector.load %arg10[%c0_52, %c2, %c0_53, %c0_54] : memref<1x4x8x8xbf16, #tpu.memory_space<vmem>>, vector<1x1x8x8xbf16>
    %98 = vector.shape_cast %97 : vector<1x1x8x8xbf16> to vector<8x8xbf16>
    %99 = vector.shape_cast %96 : vector<8x8xbf16> to vector<1x1x8x8xbf16>
    tpu.vector_store %arg10[%c0_52, %c2, %c0_53, %c0_54], %99 {strides = array<i32>} : memref<1x4x8x8xbf16, #tpu.memory_space<vmem>>, vector<1x1x8x8xbf16>,
    %100 = vector.extract_strided_slice %71 {offsets = [0, 16], sizes = [8, 8], strides = [1, 1]} : vector<8x64xbf16> to vector<8x8xbf16>
    %c0_55 = arith.constant 0 : index
    %c2_56 = arith.constant 2 : index
    %c0_57 = arith.constant 0 : index
    %c0_58 = arith.constant 0 : index
    %101 = vector.load %arg11[%c0_55, %c2_56, %c0_57, %c0_58] : memref<1x4x8x8xbf16, #tpu.memory_space<vmem>>, vector<1x1x8x8xbf16>
    %102 = vector.shape_cast %101 : vector<1x1x8x8xbf16> to vector<8x8xbf16>
    %103 = vector.shape_cast %100 : vector<8x8xbf16> to vector<1x1x8x8xbf16>
    tpu.vector_store %arg11[%c0_55, %c2_56, %c0_57, %c0_58], %103 {strides = array<i32>} : memref<1x4x8x8xbf16, #tpu.memory_space<vmem>>, vector<1x1x8x8xbf16>,
    %104 = vector.extract_strided_slice %71 {offsets = [0, 48], sizes = [8, 8], strides = [1, 1]} : vector<8x64xbf16> to vector<8x8xbf16>
    %c0_59 = arith.constant 0 : index
    %c2_60 = arith.constant 2 : index
    %c0_61 = arith.constant 0 : index
    %c0_62 = arith.constant 0 : index
    %105 = vector.load %arg12[%c0_59, %c2_60, %c0_61, %c0_62] : memref<1x4x8x8xbf16, #tpu.memory_space<vmem>>, vector<1x1x8x8xbf16>
    %106 = vector.shape_cast %105 : vector<1x1x8x8xbf16> to vector<8x8xbf16>
    %107 = vector.shape_cast %104 : vector<8x8xbf16> to vector<1x1x8x8xbf16>
    tpu.vector_store %arg12[%c0_59, %c2_60, %c0_61, %c0_62], %107 {strides = array<i32>} : memref<1x4x8x8xbf16, #tpu.memory_space<vmem>>, vector<1x1x8x8xbf16>,
    %108 = vector.extract_strided_slice %38 {offsets = [0, 24], sizes = [8, 8], strides = [1, 1]} : vector<8x32xbf16> to vector<8x8xbf16>
    %c0_63 = arith.constant 0 : index
    %c3 = arith.constant 3 : index
    %c0_64 = arith.constant 0 : index
    %c0_65 = arith.constant 0 : index
    %109 = vector.load %arg10[%c0_63, %c3, %c0_64, %c0_65] : memref<1x4x8x8xbf16, #tpu.memory_space<vmem>>, vector<1x1x8x8xbf16>
    %110 = vector.shape_cast %109 : vector<1x1x8x8xbf16> to vector<8x8xbf16>
    %111 = vector.shape_cast %108 : vector<8x8xbf16> to vector<1x1x8x8xbf16>
    tpu.vector_store %arg10[%c0_63, %c3, %c0_64, %c0_65], %111 {strides = array<i32>} : memref<1x4x8x8xbf16, #tpu.memory_space<vmem>>, vector<1x1x8x8xbf16>,
    %112 = vector.extract_strided_slice %71 {offsets = [0, 24], sizes = [8, 8], strides = [1, 1]} : vector<8x64xbf16> to vector<8x8xbf16>
    %c0_66 = arith.constant 0 : index
    %c3_67 = arith.constant 3 : index
    %c0_68 = arith.constant 0 : index
    %c0_69 = arith.constant 0 : index
    %113 = vector.load %arg11[%c0_66, %c3_67, %c0_68, %c0_69] : memref<1x4x8x8xbf16, #tpu.memory_space<vmem>>, vector<1x1x8x8xbf16>
    %114 = vector.shape_cast %113 : vector<1x1x8x8xbf16> to vector<8x8xbf16>
    %115 = vector.shape_cast %112 : vector<8x8xbf16> to vector<1x1x8x8xbf16>
    tpu.vector_store %arg11[%c0_66, %c3_67, %c0_68, %c0_69], %115 {strides = array<i32>} : memref<1x4x8x8xbf16, #tpu.memory_space<vmem>>, vector<1x1x8x8xbf16>,
    %116 = vector.extract_strided_slice %71 {offsets = [0, 56], sizes = [8, 8], strides = [1, 1]} : vector<8x64xbf16> to vector<8x8xbf16>
    %c0_70 = arith.constant 0 : index
    %c3_71 = arith.constant 3 : index
    %c0_72 = arith.constant 0 : index
    %c0_73 = arith.constant 0 : index
    %117 = vector.load %arg12[%c0_70, %c3_71, %c0_72, %c0_73] : memref<1x4x8x8xbf16, #tpu.memory_space<vmem>>, vector<1x1x8x8xbf16>
    %118 = vector.shape_cast %117 : vector<1x1x8x8xbf16> to vector<8x8xbf16>
    %119 = vector.shape_cast %116 : vector<8x8xbf16> to vector<1x1x8x8xbf16>
    tpu.vector_store %arg12[%c0_70, %c3_71, %c0_72, %c0_73], %119 {strides = array<i32>} : memref<1x4x8x8xbf16, #tpu.memory_space<vmem>>, vector<1x1x8x8xbf16>,
    return
  }
  func.func @transform_0(%arg0: i32, %arg1: i32) -> (i32, i32, i32) {
    %c0_i32 = arith.constant 0 : i32
    %c0_i32_0 = arith.constant 0 : i32
    return %arg0, %arg1, %c0_i32 : i32, i32, i32
  }
  func.func @transform_1(%arg0: i32, %arg1: i32) -> (i32, i32, i32) {
    %c0_i32 = arith.constant 0 : i32
    %c0_i32_0 = arith.constant 0 : i32
    return %arg0, %arg1, %c0_i32 : i32, i32, i32
  }
  func.func @transform_2(%arg0: i32, %arg1: i32) -> (i32, i32) {
    %c0_i32 = arith.constant 0 : i32
    %c0_i32_0 = arith.constant 0 : i32
    %c0_i32_1 = arith.constant 0 : i32
    return %c0_i32, %c0_i32_0 : i32, i32
  }
  func.func @transform_3(%arg0: i32, %arg1: i32) -> (i32, i32) {
    %c0_i32 = arith.constant 0 : i32
    %c0_i32_0 = arith.constant 0 : i32
    %c0_i32_1 = arith.constant 0 : i32
    return %c0_i32, %c0_i32_0 : i32, i32
  }
  func.func @transform_4(%arg0: i32, %arg1: i32) -> (i32, i32) {
    %c0_i32 = arith.constant 0 : i32
    %c0_i32_0 = arith.constant 0 : i32
    %c0_i32_1 = arith.constant 0 : i32
    return %c0_i32, %c0_i32_0 : i32, i32
  }
  func.func @transform_5(%arg0: i32, %arg1: i32) -> (i32, i32) {
    %c0_i32 = arith.constant 0 : i32
    %c0_i32_0 = arith.constant 0 : i32
    %c0_i32_1 = arith.constant 0 : i32
    return %c0_i32, %c0_i32_0 : i32, i32
  }
  func.func @transform_6(%arg0: i32, %arg1: i32) -> (i32, i32) {
    %c0_i32 = arith.constant 0 : i32
    %c0_i32_0 = arith.constant 0 : i32
    %c0_i32_1 = arith.constant 0 : i32
    return %c0_i32, %c0_i32_0 : i32, i32
  }
  func.func @transform_7(%arg0: i32, %arg1: i32) -> (i32, i32) {
    %c0_i32 = arith.constant 0 : i32
    %c0_i32_0 = arith.constant 0 : i32
    %c0_i32_1 = arith.constant 0 : i32
    return %c0_i32, %c0_i32_0 : i32, i32
  }
  func.func @transform_8(%arg0: i32, %arg1: i32) -> (i32, i32, i32, i32) {
    %c0_i32 = arith.constant 0 : i32
    %c0_i32_0 = arith.constant 0 : i32
    %c0_i32_1 = arith.constant 0 : i32
    return %arg0, %c0_i32, %arg1, %c0_i32_0 : i32, i32, i32, i32
  }
  func.func @transform_9(%arg0: i32, %arg1: i32) -> (i32, i32, i32, i32) {
    %c0_i32 = arith.constant 0 : i32
    %c0_i32_0 = arith.constant 0 : i32
    %c0_i32_1 = arith.constant 0 : i32
    return %arg0, %c0_i32, %arg1, %c0_i32_0 : i32, i32, i32, i32
  }
  func.func @transform_10(%arg0: i32, %arg1: i32) -> (i32, i32, i32, i32) {
    %c0_i32 = arith.constant 0 : i32
    %c0_i32_0 = arith.constant 0 : i32
    %c0_i32_1 = arith.constant 0 : i32
    return %arg0, %c0_i32, %arg1, %c0_i32_0 : i32, i32, i32, i32
  }
}

</mosaic_0001>

<llo_original>
// kernel: tpu_custom_call.1
$region0: #{tpu_custom_call.1}
  #allocation0 [shape = 'u32[]', space=smem, size = 0x4, offset = 0x4, fixed_abs, tag = 'smem constant byte address 0x4 - core index']
  #allocation1 [shape = 'u32[144,128]{1,0:T(1,128)}', space=vmem, size = 0x12000, scoped, tag = 'internal scratch']
  %s0 = inlined_call_operand.hbm [shape: f32[2,8,32], index: 0, kind: input, shape index: {}]
  %s1 = inlined_call_operand.hbm [shape: f32[2,8,32], index: 1, kind: input, shape index: {}]
  %s2 = inlined_call_operand.hbm [shape: bf16[32,32], index: 2, kind: input, shape index: {}]
  %s3 = inlined_call_operand.vmem [shape: f32[1,32], index: 3, kind: input, shape index: {}]
  %s4 = inlined_call_operand.hbm [shape: bf16[32,64], index: 4, kind: input, shape index: {}]
  %s5 = inlined_call_operand.vmem [shape: f32[1,64], index: 5, kind: input, shape index: {}]
  %s6 = inlined_call_operand.vmem [shape: f32[1,32], index: 6, kind: input, shape index: {}]
  %s7 = inlined_call_operand.vmem [shape: f32[1,32], index: 7, kind: input, shape index: {}]
  %s8 = inlined_call_operand.hbm [shape: bf16[2,4,8,8], index: 8, kind: output, shape index: {0}]
  %s9 = inlined_call_operand.hbm [shape: bf16[2,4,8,8], index: 9, kind: output, shape index: {1}]
  %s10 = inlined_call_operand.hbm [shape: bf16[2,4,8,8], index: 10, kind: output, shape index: {2}]
  %11 = xla_tuple %s8, %s9, %s10
  %s12 = sld [smem:[#allocation0]]
  $region97: #{tpu_custom_call.1} parent=0
    _
  %s14 = ssub.s32 1, %s12
  %s15 = scalar_select 0, %s14, %s12
  $region1: #{tpu_custom_call.1} parent=0
    #allocation2 [shape = 'u8[8192]{0}', space=vmem, size = 0x2000, scoped, tag = 'input window, operand 0']
    #allocation3 [shape = 's32[2]{0}', space=sflag, size = 0x8, scoped, tag = 'scoped memory for tpu_custom_call.1']
    #allocation4 [shape = 's32[2]{0}', space=sflag, size = 0x8, scoped, tag = 'scoped memory for tpu_custom_call.1']
    #allocation5 [shape = 'u8[8192]{0}', space=vmem, size = 0x2000, scoped, tag = 'input window, operand 1']
    #allocation6 [shape = 's32[2]{0}', space=sflag, size = 0x8, scoped, tag = 'scoped memory for tpu_custom_call.1']
    #allocation7 [shape = 'u8[8192]{0}', space=vmem, size = 0x2000, scoped, tag = 'input window, operand 2, single buffered']
    #allocation8 [shape = 'u8[8192]{0}', space=vmem, size = 0x2000, scoped, tag = 'input window, operand 4, single buffered']
    #allocation9 [shape = 's32[1]{0}', space=sflag, size = 0x4, scoped, tag = 'scoped memory for tpu_custom_call.1']
    #allocation10 [shape = 'u8[16384]{0}', space=vmem, size = 0x4000, scoped, tag = 'output window, operand 0']
    #allocation11 [shape = 'u8[16384]{0}', space=vmem, size = 0x4000, scoped, tag = 'output window, operand 1']
    #allocation12 [shape = 's32[2]{0}', space=sflag, size = 0x8, scoped, tag = 'scoped memory for tpu_custom_call.1']
    #allocation13 [shape = 'u8[16384]{0}', space=vmem, size = 0x4000, scoped, tag = 'output window, operand 2']
    %16 = vsyncpa [#allocation3], 0
    %s17 = scalar_lea.sflag [#allocation3], 1
    %18 = vsyncpa %s17, 0
    %19 = vsyncpa [#allocation6], 0
    %s20 = scalar_lea.sflag [#allocation6], 1
    %21 = vsyncpa %s20, 0
    %22 = vsyncpa [#allocation9], 0
    %23 = vsyncpa [#allocation4], 0
    %s24 = scalar_lea.sflag [#allocation4], 1
    %25 = vsyncpa %s24, 0
    %26 = vsyncpa [#allocation12], 0
    %s27 = scalar_lea.sflag [#allocation12], 1
    %28 = vsyncpa %s27, 0
    loop: start=0, step=1, limit=4
    $region2: #{tpu_custom_call.1} parent=1 // loop_pre_header
      _
    $region3: #{tpu_custom_call.1} parent=1 // loop_header
      %s30 = sphi 0, %s34
      %p31 = scmp.ge.s32.totalorder %s30, 4
      %s37 = sphi 0, %s49
      %s38 = sphi 0, %s45
      %s39 = sphi 0, %s37
      %s40 = sphi 0, %s38
      %s41 = sphi 0, %s39
      %s42 = sphi 0, %s40
      %s54 = sphi 0, %s56
      %s57 = sphi 0, %s54
      %s58 = sphi 0, %s57
      %s74 = sphi 0, %s58
      %s82 = sphi 0, %s84
      %s85 = sphi 0, %s82
      %s86 = sphi 0, %s85
      %s102 = sphi 0, %s86
      %s106 = sphi 0, %s106
      %s108 = sphi 0, %s106
      %s109 = sphi 0, %s108
      %s123 = sphi 0, %s109
      %s127 = sphi 0, %s127
      %s129 = sphi 0, %s127
      %s130 = sphi 0, %s129
      %s144 = sphi 0, %s130
      %s148 = sphi 0, %s148
      %s150 = sphi 0, %s148
      %s151 = sphi 0, %s150
      %s165 = sphi 0, %s151
      %s169 = sphi 0, %s169
      %s171 = sphi 0, %s169
      %s172 = sphi 0, %s171
      %s186 = sphi 0, %s172
      %s190 = sphi 0, %s190
      %s192 = sphi 0, %s190
      %s193 = sphi 0, %s192
      %s207 = sphi 0, %s193
      %s211 = sphi 0, %s211
      %s213 = sphi 0, %s211
      %s214 = sphi 0, %s213
      %s228 = sphi 0, %s214
      %s236 = sphi 0, %s238
      %s239 = sphi 0, %s236
      %s240 = sphi 0, %s239
      %s256 = sphi 0, %s240
      %s264 = sphi 0, %s266
      %s267 = sphi 0, %s264
      %s268 = sphi 0, %s267
      %s284 = sphi 0, %s268
      %s292 = sphi 0, %s294
      %s295 = sphi 0, %s292
      %s296 = sphi 0, %s295
      %s312 = sphi 0, %s296
    $region4: #{tpu_custom_call.1} parent=1 // loop_header_branch
      %33 = sbr.rel (%p31) target = $region8
    $region5: #{tpu_custom_call.1} parent=1 // loop_body
      %s35 = ssub.s32 %s30, 1
      %s36 = ssub.s32 %s30, 2
      %s43 = sadd.s32 1, %s38
      %p44 = scmp.ge.s32.totalorder %s43, 1
      %s45 = scalar_select %p44, 0, %s43
      %s46 = sadd.s32 1, %s37
      %s47 = scalar_select %p44, %s46, %s37
      %p48 = scmp.ge.s32.totalorder %s47, 2
      %s49 = scalar_select %p48, 0, %s47
      %s50 = ssub.s32 %s37, %s49
      %s51 = ssub.s32 %s38, %s45
      %s52 = sor.u32 %s50, %s51
      %p53 = scmp.eq.s32.totalorder %s52, 0
      %s55 = sadd.s32 %s54, 1
      %s56 = scalar_select %p53, %s54, %s55
      %p59 = pneg %p53
      %p60 = scmp.eq.s32.totalorder %s30, 1
      %p61 = por %p59, %p60
      %p62 = scmp.ne.s32.totalorder %s54, %s57
      %p63 = scmp.eq.s32.totalorder %s30, 0
      %p64 = por %p62, %p63
      %p65 = scmp.ne.s32.totalorder %s54, %s57
      %p66 = scmp.eq.s32.totalorder %s35, 1
      %p67 = por %p65, %p66
      %p68 = scmp.ne.s32.totalorder %s57, %s58
      %p69 = scmp.eq.s32.totalorder %s35, 0
      %p70 = por %p68, %p69
      %p71 = scmp.ne.s32.totalorder %s57, %s58
      %p72 = scmp.eq.s32.totalorder %s36, 1
      %p73 = por %p71, %p72
      %p75 = scmp.ne.s32.totalorder %s58, %s74
      %p76 = scmp.eq.s32.totalorder %s36, 0
      %p77 = por %p75, %p76
      %s78 = ssub.s32 %s37, %s49
      %s79 = ssub.s32 %s38, %s45
      %s80 = sor.u32 %s78, %s79
      %p81 = scmp.eq.s32.totalorder %s80, 0
      %s83 = sadd.s32 %s82, 1
      %s84 = scalar_select %p81, %s82, %s83
      %p87 = pneg %p81
      %p88 = scmp.eq.s32.totalorder %s30, 1
      %p89 = por %p87, %p88
      %p90 = scmp.ne.s32.totalorder %s82, %s85
      %p91 = scmp.eq.s32.totalorder %s30, 0
      %p92 = por %p90, %p91
      %p93 = scmp.ne.s32.totalorder %s82, %s85
      %p94 = scmp.eq.s32.totalorder %s35, 1
      %p95 = por %p93, %p94
      %p96 = scmp.ne.s32.totalorder %s85, %s86
      %p97 = scmp.eq.s32.totalorder %s35, 0
      %p98 = por %p96, %p97
      %p99 = scmp.ne.s32.totalorder %s85, %s86
      %p100 = scmp.eq.s32.totalorder %s36, 1
      %p101 = por %p99, %p100
      %p103 = scmp.ne.s32.totalorder %s86, %s102
      %p104 = scmp.eq.s32.totalorder %s36, 0
      %p105 = por %p103, %p104
      %s107 = sadd.s32 %s106, 1
      %p110 = scmp.eq.s32.totalorder %s30, 1
      %p111 = scmp.ne.s32.totalorder %s106, %s108
      %p112 = scmp.eq.s32.totalorder %s30, 0
      %p113 = por %p111, %p112
      %p114 = scmp.ne.s32.totalorder %s106, %s108
      %p115 = scmp.eq.s32.totalorder %s35, 1
      %p116 = por %p114, %p115
      %p117 = scmp.ne.s32.totalorder %s108, %s109
      %p118 = scmp.eq.s32.totalorder %s35, 0
      %p119 = por %p117, %p118
      %p120 = scmp.ne.s32.totalorder %s108, %s109
      %p121 = scmp.eq.s32.totalorder %s36, 1
      %p122 = por %p120, %p121
      %p124 = scmp.ne.s32.totalorder %s109, %s123
      %p125 = scmp.eq.s32.totalorder %s36, 0
      %p126 = por %p124, %p125
      %s128 = sadd.s32 %s127, 1
      %p131 = scmp.eq.s32.totalorder %s30, 1
      %p132 = scmp.ne.s32.totalorder %s127, %s129
      %p133 = scmp.eq.s32.totalorder %s30, 0
      %p134 = por %p132, %p133
      %p135 = scmp.ne.s32.totalorder %s127, %s129
      %p136 = scmp.eq.s32.totalorder %s35, 1
      %p137 = por %p135, %p136
      %p138 = scmp.ne.s32.totalorder %s129, %s130
      %p139 = scmp.eq.s32.totalorder %s35, 0
      %p140 = por %p138, %p139
      %p141 = scmp.ne.s32.totalorder %s129, %s130
      %p142 = scmp.eq.s32.totalorder %s36, 1
      %p143 = por %p141, %p142
      %p145 = scmp.ne.s32.totalorder %s130, %s144
      %p146 = scmp.eq.s32.totalorder %s36, 0
      %p147 = por %p145, %p146
      %s149 = sadd.s32 %s148, 1
      %p152 = scmp.eq.s32.totalorder %s30, 1
      %p153 = scmp.ne.s32.totalorder %s148, %s150
      %p154 = scmp.eq.s32.totalorder %s30, 0
      %p155 = por %p153, %p154
      %p156 = scmp.ne.s32.totalorder %s148, %s150
      %p157 = scmp.eq.s32.totalorder %s35, 1
      %p158 = por %p156, %p157
      %p159 = scmp.ne.s32.totalorder %s150, %s151
      %p160 = scmp.eq.s32.totalorder %s35, 0
      %p161 = por %p159, %p160
      %p162 = scmp.ne.s32.totalorder %s150, %s151
      %p163 = scmp.eq.s32.totalorder %s36, 1
      %p164 = por %p162, %p163
      %p166 = scmp.ne.s32.totalorder %s151, %s165
      %p167 = scmp.eq.s32.totalorder %s36, 0
      %p168 = por %p166, %p167
      %s170 = sadd.s32 %s169, 1
      %p173 = scmp.eq.s32.totalorder %s30, 1
      %p174 = scmp.ne.s32.totalorder %s169, %s171
      %p175 = scmp.eq.s32.totalorder %s30, 0
      %p176 = por %p174, %p175
      %p177 = scmp.ne.s32.totalorder %s169, %s171
      %p178 = scmp.eq.s32.totalorder %s35, 1
      %p179 = por %p177, %p178
      %p180 = scmp.ne.s32.totalorder %s171, %s172
      %p181 = scmp.eq.s32.totalorder %s35, 0
      %p182 = por %p180, %p181
      %p183 = scmp.ne.s32.totalorder %s171, %s172
      %p184 = scmp.eq.s32.totalorder %s36, 1
      %p185 = por %p183, %p184
      %p187 = scmp.ne.s32.totalorder %s172, %s186
      %p188 = scmp.eq.s32.totalorder %s36, 0
      %p189 = por %p187, %p188
      %s191 = sadd.s32 %s190, 1
      %p194 = scmp.eq.s32.totalorder %s30, 1
      %p195 = scmp.ne.s32.totalorder %s190, %s192
      %p196 = scmp.eq.s32.totalorder %s30, 0
      %p197 = por %p195, %p196
      %p198 = scmp.ne.s32.totalorder %s190, %s192
      %p199 = scmp.eq.s32.totalorder %s35, 1
      %p200 = por %p198, %p199
      %p201 = scmp.ne.s32.totalorder %s192, %s193
      %p202 = scmp.eq.s32.totalorder %s35, 0
      %p203 = por %p201, %p202
      %p204 = scmp.ne.s32.totalorder %s192, %s193
      %p205 = scmp.eq.s32.totalorder %s36, 1
      %p206 = por %p204, %p205
      %p208 = scmp.ne.s32.totalorder %s193, %s207
      %p209 = scmp.eq.s32.totalorder %s36, 0
      %p210 = por %p208, %p209
      %s212 = sadd.s32 %s211, 1
      %p215 = scmp.eq.s32.totalorder %s30, 1
      %p216 = scmp.ne.s32.totalorder %s211, %s213
      %p217 = scmp.eq.s32.totalorder %s30, 0
      %p218 = por %p216, %p217
      %p219 = scmp.ne.s32.totalorder %s211, %s213
      %p220 = scmp.eq.s32.totalorder %s35, 1
      %p221 = por %p219, %p220
      %p222 = scmp.ne.s32.totalorder %s213, %s214
      %p223 = scmp.eq.s32.totalorder %s35, 0
      %p224 = por %p222, %p223
      %p225 = scmp.ne.s32.totalorder %s213, %s214
      %p226 = scmp.eq.s32.totalorder %s36, 1
      %p227 = por %p225, %p226
      %p229 = scmp.ne.s32.totalorder %s214, %s228
      %p230 = scmp.eq.s32.totalorder %s36, 0
      %p231 = por %p229, %p230
      %s232 = ssub.s32 %s37, %s49
      %s233 = ssub.s32 %s38, %s45
      %s234 = sor.u32 %s232, %s233
      %p235 = scmp.eq.s32.totalorder %s234, 0
      %s237 = sadd.s32 %s236, 1
      %s238 = scalar_select %p235, %s236, %s237
      %p241 = pneg %p235
      %p242 = scmp.eq.s32.totalorder %s30, 1
      %p243 = por %p241, %p242
      %p244 = scmp.ne.s32.totalorder %s236, %s239
      %p245 = scmp.eq.s32.totalorder %s30, 0
      %p246 = por %p244, %p245
      %p247 = scmp.ne.s32.totalorder %s236, %s239
      %p248 = scmp.eq.s32.totalorder %s35, 1
      %p249 = por %p247, %p248
      %p250 = scmp.ne.s32.totalorder %s239, %s240
      %p251 = scmp.eq.s32.totalorder %s35, 0
      %p252 = por %p250, %p251
      %p253 = scmp.ne.s32.totalorder %s239, %s240
      %p254 = scmp.eq.s32.totalorder %s36, 1
      %p255 = por %p253, %p254
      %p257 = scmp.ne.s32.totalorder %s240, %s256
      %p258 = scmp.eq.s32.totalorder %s36, 0
      %p259 = por %p257, %p258
      %s260 = ssub.s32 %s37, %s49
      %s261 = ssub.s32 %s38, %s45
      %s262 = sor.u32 %s260, %s261
      %p263 = scmp.eq.s32.totalorder %s262, 0
      %s265 = sadd.s32 %s264, 1
      %s266 = scalar_select %p263, %s264, %s265
      %p269 = pneg %p263
      %p270 = scmp.eq.s32.totalorder %s30, 1
      %p271 = por %p269, %p270
      %p272 = scmp.ne.s32.totalorder %s264, %s267
      %p273 = scmp.eq.s32.totalorder %s30, 0
      %p274 = por %p272, %p273
      %p275 = scmp.ne.s32.totalorder %s264, %s267
      %p276 = scmp.eq.s32.totalorder %s35, 1
      %p277 = por %p275, %p276
      %p278 = scmp.ne.s32.totalorder %s267, %s268
      %p279 = scmp.eq.s32.totalorder %s35, 0
      %p280 = por %p278, %p279
      %p281 = scmp.ne.s32.totalorder %s267, %s268
      %p282 = scmp.eq.s32.totalorder %s36, 1
      %p283 = por %p281, %p282
      %p285 = scmp.ne.s32.totalorder %s268, %s284
      %p286 = scmp.eq.s32.totalorder %s36, 0
      %p287 = por %p285, %p286
      %s288 = ssub.s32 %s37, %s49
      %s289 = ssub.s32 %s38, %s45
      %s290 = sor.u32 %s288, %s289
      %p291 = scmp.eq.s32.totalorder %s290, 0
      %s293 = sadd.s32 %s292, 1
      %s294 = scalar_select %p291, %s292, %s293
      %p297 = pneg %p291
      %p298 = scmp.eq.s32.totalorder %s30, 1
      %p299 = por %p297, %p298
      %p300 = scmp.ne.s32.totalorder %s292, %s295
      %p301 = scmp.eq.s32.totalorder %s30, 0
      %p302 = por %p300, %p301
      %p303 = scmp.ne.s32.totalorder %s292, %s295
      %p304 = scmp.eq.s32.totalorder %s35, 1
      %p305 = por %p303, %p304
      %p306 = scmp.ne.s32.totalorder %s295, %s296
      %p307 = scmp.eq.s32.totalorder %s35, 0
      %p308 = por %p306, %p307
      %p309 = scmp.ne.s32.totalorder %s295, %s296
      %p310 = scmp.eq.s32.totalorder %s36, 1
      %p311 = por %p309, %p310
      %p313 = scmp.ne.s32.totalorder %s296, %s312
      %p314 = scmp.eq.s32.totalorder %s36, 0
      %p315 = por %p313, %p314
      %p316 = scmp.le.s32.totalorder 1, %s30
      %p317 = scmp.lt.s32.totalorder %s30, 3
      %p318 = pnand %p316, %p317
      %p319 = pneg %p318
      // Predicated region
      $region9: #{tpu_custom_call.1} parent=5 // pred_check
        _
      $region10: #{tpu_custom_call.1} parent=5 // pred_check_branch
        %321 = sbr.rel (%p318) target = $region12
      $region11: #{tpu_custom_call.1} parent=5 // pred_region
        %s322 = ssub.s32 %s30, 1
        // Predicated region
        $region13: #{tpu_custom_call.1} parent=11 // pred_check
          %p323 = pneg %p119
        $region14: #{tpu_custom_call.1} parent=11 // pred_check_branch
          %325 = sbr.rel (%p323) target = $region16
        $region15: #{tpu_custom_call.1} parent=11 // pred_region
          %s327 = ssub.s32 256, 256
          %328 = vsyncadd [#allocation6], %s327
          %s329 = sshll.u32 [#allocation7], 4
          %s330 = int_to_ptr.vmem [resolvable:$true] %s329
          %335 = dma.hbm_to_vmem [thread:$0]  %s2, 256, %s330, [#allocation6], 64, 64, 4
        $region16: #{tpu_custom_call.1} parent=11 // pred_fallthru
          _
        // Predicated region
        $region17: #{tpu_custom_call.1} parent=11 // pred_check
          %p336 = pneg %p140
        $region18: #{tpu_custom_call.1} parent=11 // pred_check_branch
          %338 = sbr.rel (%p336) target = $region20
        $region19: #{tpu_custom_call.1} parent=11 // pred_region
          _
        $region20: #{tpu_custom_call.1} parent=11 // pred_fallthru
          _
        // Predicated region
        $region21: #{tpu_custom_call.1} parent=11 // pred_check
          %p339 = pneg %p161
        $region22: #{tpu_custom_call.1} parent=11 // pred_check_branch
          %341 = sbr.rel (%p339) target = $region24
        $region23: #{tpu_custom_call.1} parent=11 // pred_region
          %s343 = ssub.s32 256, 256
          %344 = vsyncadd [#allocation9], %s343
          %s345 = sshll.u32 [#allocation8], 4
          %s346 = int_to_ptr.vmem [resolvable:$true] %s345
          %351 = dma.hbm_to_vmem [thread:$0]  %s4, 256, %s346, [#allocation9], 64, 64, 4
        $region24: #{tpu_custom_call.1} parent=11 // pred_fallthru
          _
        // Predicated region
        $region25: #{tpu_custom_call.1} parent=11 // pred_check
          %p352 = pneg %p182
        $region26: #{tpu_custom_call.1} parent=11 // pred_check_branch
          %354 = sbr.rel (%p352) target = $region28
        $region27: #{tpu_custom_call.1} parent=11 // pred_region
          _
        $region28: #{tpu_custom_call.1} parent=11 // pred_fallthru
          _
        // Predicated region
        $region29: #{tpu_custom_call.1} parent=11 // pred_check
          %p355 = pneg %p203
        $region30: #{tpu_custom_call.1} parent=11 // pred_check_branch
          %357 = sbr.rel (%p355) target = $region32
        $region31: #{tpu_custom_call.1} parent=11 // pred_region
          _
        $region32: #{tpu_custom_call.1} parent=11 // pred_fallthru
          _
        // Predicated region
        $region33: #{tpu_custom_call.1} parent=11 // pred_check
          %p358 = pneg %p224
        $region34: #{tpu_custom_call.1} parent=11 // pred_check_branch
          %360 = sbr.rel (%p358) target = $region36
        $region35: #{tpu_custom_call.1} parent=11 // pred_region
          _
        $region36: #{tpu_custom_call.1} parent=11 // pred_fallthru
          _
      $region12: #{tpu_custom_call.1} parent=5 // pred_fallthru
        _
      %p361 = scmp.lt.s32.totalorder %s30, 2
      // Predicated region
      $region37: #{tpu_custom_call.1} parent=5 // pred_check
        %p362 = pneg %p361
      $region38: #{tpu_custom_call.1} parent=5 // pred_check_branch
        %364 = sbr.rel (%p362) target = $region40
      $region39: #{tpu_custom_call.1} parent=5 // pred_region
        // Predicated region
        $region41: #{tpu_custom_call.1} parent=39 // pred_check
          %p365 = pneg %p64
        $region42: #{tpu_custom_call.1} parent=39 // pred_check_branch
          %367 = sbr.rel (%p365) target = $region44
        $region43: #{tpu_custom_call.1} parent=39 // pred_region
          %s368 = sand.u32 %s54, 1
          %s369 = scalar_lea.sflag [#allocation3], %s368
          %s370 = sand.u32 %s54, 1
          %s371 = smul.addr %s370, 8
          %s372 = scalar_lea.vmem [#allocation2], %s371
          %s374 = ssub.s32 128, 128
          %375 = vsyncadd %s369, %s374
          %s376 = sadd.s32 %s38, %s37
          %s377 = smul.addr %s376, 128
          %s378 = scalar_lea.hbm %s0, %s377
          %s380 = sshll.u32 %s372, 4
          %s381 = int_to_ptr.vmem [resolvable:$true] %s380
          %383 = dma.hbm_to_vmem [thread:$0]  %s378, 128, %s381, %s369
        $region44: #{tpu_custom_call.1} parent=39 // pred_fallthru
          _
        // Predicated region
        $region45: #{tpu_custom_call.1} parent=39 // pred_check
          %p384 = pneg %p92
        $region46: #{tpu_custom_call.1} parent=39 // pred_check_branch
          %386 = sbr.rel (%p384) target = $region48
        $region47: #{tpu_custom_call.1} parent=39 // pred_region
          %s387 = sand.u32 %s30, 1
          %s388 = scalar_lea.sflag [#allocation6], %s387
          %s389 = sand.u32 %s82, 1
          %s390 = smul.addr %s389, 8
          %s391 = scalar_lea.vmem [#allocation5], %s390
          %s393 = ssub.s32 128, 128
          %394 = vsyncadd %s388, %s393
          %s395 = sadd.s32 %s38, %s37
          %s396 = smul.addr %s395, 128
          %s397 = scalar_lea.hbm %s1, %s396
          %s399 = sshll.u32 %s391, 4
          %s400 = int_to_ptr.vmem [resolvable:$true] %s399
          %402 = dma.hbm_to_vmem [thread:$0]  %s397, 128, %s400, %s388
        $region48: #{tpu_custom_call.1} parent=39 // pred_fallthru
          _
      $region40: #{tpu_custom_call.1} parent=5 // pred_fallthru
        _
      %p403 = scmp.le.s32.totalorder 1, %s30
      %p404 = scmp.lt.s32.totalorder %s30, 3
      %p405 = pnand %p403, %p404
      %p406 = pneg %p405
      // Predicated region
      $region49: #{tpu_custom_call.1} parent=5 // pred_check
        _
      $region50: #{tpu_custom_call.1} parent=5 // pred_check_branch
        %408 = sbr.rel (%p405) target = $region52
      $region51: #{tpu_custom_call.1} parent=5 // pred_region
        %s409 = ssub.s32 %s30, 1
        %s410 = sand.u32 %s57, 1
        %s411 = scalar_lea.sflag [#allocation3], %s410
        %s412 = sand.u32 %s57, 1
        %s413 = smul.addr %s412, 8
        %s414 = scalar_lea.vmem [#allocation2], %s413
        // Predicated region
        $region53: #{tpu_custom_call.1} parent=51 // pred_check
          %p415 = pneg %p70
        $region54: #{tpu_custom_call.1} parent=51 // pred_check_branch
          %417 = sbr.rel (%p415) target = $region56
        $region55: #{tpu_custom_call.1} parent=51 // pred_region
          %418 = dma.done %s411, 128
        $region56: #{tpu_custom_call.1} parent=51 // pred_fallthru
          _
        %s419 = sand.u32 %s35, 1
        %s420 = scalar_lea.sflag [#allocation6], %s419
        %s421 = sand.u32 %s85, 1
        %s422 = smul.addr %s421, 8
        %s423 = scalar_lea.vmem [#allocation5], %s422
        // Predicated region
        $region57: #{tpu_custom_call.1} parent=51 // pred_check
          %p424 = pneg %p98
        $region58: #{tpu_custom_call.1} parent=51 // pred_check_branch
          %426 = sbr.rel (%p424) target = $region60
        $region59: #{tpu_custom_call.1} parent=51 // pred_region
          %427 = dma.done %s420, 128
        $region60: #{tpu_custom_call.1} parent=51 // pred_fallthru
          _
        // Predicated region
        $region61: #{tpu_custom_call.1} parent=51 // pred_check
          %p428 = pneg %p119
        $region62: #{tpu_custom_call.1} parent=51 // pred_check_branch
          %430 = sbr.rel (%p428) target = $region64
        $region63: #{tpu_custom_call.1} parent=51 // pred_region
          %431 = dma.done [#allocation6], 256
        $region64: #{tpu_custom_call.1} parent=51 // pred_fallthru
          _
        // Predicated region
        $region65: #{tpu_custom_call.1} parent=51 // pred_check
          %p432 = pneg %p161
        $region66: #{tpu_custom_call.1} parent=51 // pred_check_branch
          %434 = sbr.rel (%p432) target = $region68
        $region67: #{tpu_custom_call.1} parent=51 // pred_region
          %435 = dma.done [#allocation9], 256
        $region68: #{tpu_custom_call.1} parent=51 // pred_fallthru
          _
        %s436 = sand.u32 %s57, 1
        %s437 = scalar_lea.sflag [#allocation3], %s436
        %s438 = sand.u32 %s57, 1
        %s439 = smul.addr %s438, 8
        %s440 = scalar_lea.vmem [#allocation2], %s439
        %p441 = pneg %p70
        %p442 = pneg %p67
        %s443 = sand.u32 %s35, 1
        %s444 = scalar_lea.sflag [#allocation6], %s443
        %s445 = sand.u32 %s85, 1
        %s446 = smul.addr %s445, 8
        %s447 = scalar_lea.vmem [#allocation5], %s446
        %p448 = pneg %p98
        %p449 = pneg %p95
        %p450 = pneg %p119
        %p451 = pneg %p116
        %p452 = pneg %p140
        %p453 = pneg %p137
        %p454 = pneg %p161
        %p455 = pneg %p158
        %p456 = pneg %p182
        %p457 = pneg %p179
        %p458 = pneg %p203
        %p459 = pneg %p200
        %p460 = pneg %p224
        %p461 = pneg %p221
        %p462 = pneg %p252
        %p463 = pneg %p249
        %s464 = sand.u32 %s239, 1
        %s465 = scalar_lea.sflag [#allocation4], %s464
        %s466 = sand.u32 %s239, 1
        %s467 = smul.addr %s466, 16
        %s468 = scalar_lea.vmem [#allocation10], %s467
        %p469 = pneg %p280
        %p470 = pneg %p277
        %s471 = sand.u32 %s35, 1
        %s472 = scalar_lea.sflag [#allocation12], %s471
        %s473 = sand.u32 %s267, 1
        %s474 = smul.addr %s473, 16
        %s475 = scalar_lea.vmem [#allocation11], %s474
        %p476 = pneg %p308
        %p477 = pneg %p305
        %s478 = sand.u32 %s35, 1
        %s479 = scalar_lea.sflag [#allocation12], %s478
        %s480 = sand.u32 %s295, 1
        %s481 = smul.addr %s480, 16
        %s482 = scalar_lea.vmem [#allocation13], %s481
        %v484 = vld [vmem:[%s6] sm:$0x1]
        %v485 = vld [vmem:[%s7] sm:$0x1]
        %v486 = vld [vmem:[%s414] sm:$0xff]
        %vm487 = vcmask 261120
        %v488 = vsel %vm487, %v486, 0.0
        %489 = vadd.xlane.f32.xlu0 %v488
        %v490 = vpop.xlane.xlu0 %489
        %v491 = vrcp.pop 32.0
        %v492 = vmul.f32 %v490, %v491
        %v493 = vsub.f32 %v486, %v492
        %v494 = vmul.f32 %v493, %v493
        %v495 = vsel %vm487, %v494, 0.0
        %496 = vadd.xlane.f32.xlu0 %v495
        %v497 = vpop.xlane.xlu0 %496
        %v498 = vmul.f32 %v497, %v491
        %v499 = vadd.f32 %v498, 1e-05
        %v500 = vrsqrt.pop %v499
        %v501 = vmul.f32 %v493, %v500
        %v503 = vlaneseq
        %v504 = vshrl.u32 %v503, 7
        %v505 = vsub.s32 0, %v504
        %v506 = vrot.slane %v484, %v505
        %v508 = vmul.f32 %v501, %v506
        %v510 = vlaneseq
        %v511 = vshrl.u32 %v510, 7
        %v512 = vsub.s32 0, %v511
        %v513 = vrot.slane %v485, %v512
        %v515 = vadd.f32 %v508, %v513
        %v516 = vpack.c.bf16 %v515, %v515
        %v517 = vld [vmem:[#allocation7] sm:$0xf]
        %v518 = vld [vmem:[#allocation7 + $0x4] sm:$0xf]
        %v519 = vld [vmem:[#allocation7 + $0x8] sm:$0xf]
        %v520 = vld [vmem:[#allocation7 + $0xc] sm:$0xf]
        %v521 = vld [vmem:[%s3] sm:$0x1]
        %v523 = vlaneseq
        %v524 = vshrl.u32 %v523, 7
        %v525 = vsub.s32 0, %v524
        %v526 = vrot.slane %v521, %v525
        %v532 = vunpack.c.l.b16 %v517
        %v533 = vunpack.c.l.b16 %v518
        %v534 = vunpack.c.l.b16 %v519
        %v535 = vunpack.c.l.b16 %v520
        %v536 = vpack.c.b16 %v533, %v532
        %v537 = vpack.c.b16 %v535, %v534
        %v541 = vsel %vm487, %v516, 0
        %543 = vmatprep.subr.bf16.mxu0 0
        %544 = vmatpush1.bf16.msra.mxu0 %v536
        %545 = vmatprep.subr.bf16.mxu0 0
        %546 = vmatpush1.bf16.msra.mxu0 %v537
        %547 = vmatprep.subr.bf16.mxu0 0
        %548 = vmatpush1.bf16.msra.mxu0 0
        %549 = vmatprep.subr.bf16.mxu0 0
        %550 = vmatpush1.bf16.msra.mxu0 0
        %551 = vmatprep.subr.bf16.mxu0 0
        %552 = vmatpush1.bf16.msra.mxu0 0
        %553 = vmatprep.subr.bf16.mxu0 0
        %554 = vmatpush1.bf16.msra.mxu0 0
        %555 = vmatprep.subr.bf16.mxu0 0
        %556 = vmatpush1.bf16.msra.mxu0 0
        %557 = vmatprep.subr.bf16.mxu0 0
        %558 = vmatpush1.bf16.msra.mxu0 0
        %559 = vmatprep.subr.bf16.mxu0 0
        %560 = vmatpush1.bf16.msra.mxu0 0
        %561 = vmatprep.subr.bf16.mxu0 0
        %562 = vmatpush1.bf16.msra.mxu0 0
        %563 = vmatprep.subr.bf16.mxu0 0
        %564 = vmatpush1.bf16.msra.mxu0 0
        %565 = vmatprep.subr.bf16.mxu0 0
        %566 = vmatpush1.bf16.msra.mxu0 0
        %567 = vmatprep.subr.bf16.mxu0 0
        %568 = vmatpush1.bf16.msra.mxu0 0
        %569 = vmatprep.subr.bf16.mxu0 0
        %570 = vmatpush1.bf16.msra.mxu0 0
        %571 = vmatprep.subr.bf16.mxu0 0
        %572 = vmatpush1.bf16.msra.mxu0 0
        %573 = vmatprep.subr.bf16.mxu0 0
        %574 = vmatpush1.bf16.msra.mxu0 0
        %575 = vmatprep.mubr.bf16.mxu0 0
        %576 = vmatmul.mubr.bf16.gmra.mrb[0].mxu0 %v541
        %v577 = vpop.f32.mrb[0].mxu0
        %v578 = vadd.f32 %v526, %v577
        %v579 = vpop.f32.mrb[0].mxu0
        %v580 = vpop.f32.mrb[0].mxu0
        %v581 = vpop.f32.mrb[0].mxu0
        %582 = vdwg.mxu0
        %v583 = vmul.f32 %v578, 0.35355338
        %v584 = vpack.c.bf16 %v583, %v583
        %v585 = vld [vmem:[%s423] sm:$0xff]
        %v586 = vsel %vm487, %v585, 0.0
        %587 = vadd.xlane.f32.xlu0 %v586
        %v588 = vpop.xlane.xlu0 %587
        %v589 = vmul.f32 %v588, %v491
        %v590 = vsub.f32 %v585, %v589
        %v591 = vmul.f32 %v590, %v590
        %v592 = vsel %vm487, %v591, 0.0
        %593 = vadd.xlane.f32.xlu0 %v592
        %v594 = vpop.xlane.xlu0 %593
        %v595 = vmul.f32 %v594, %v491
        %v596 = vadd.f32 %v595, 1e-05
        %v597 = vrsqrt.pop %v596
        %v598 = vmul.f32 %v590, %v597
        %v599 = vmul.f32 %v598, %v506
        %v600 = vadd.f32 %v599, %v513
        %v601 = vpack.c.bf16 %v600, %v600
        %v602 = vld [vmem:[#allocation8] sm:$0xf]
        %v603 = vld [vmem:[#allocation8 + $0x4] sm:$0xf]
        %v604 = vld [vmem:[#allocation8 + $0x8] sm:$0xf]
        %v605 = vld [vmem:[#allocation8 + $0xc] sm:$0xf]
        %v606 = vld [vmem:[%s5] sm:$0x1]
        %v608 = vlaneseq
        %v609 = vshrl.u32 %v608, 7
        %v610 = vsub.s32 0, %v609
        %v611 = vrot.slane %v606, %v610
        %v617 = vunpack.c.l.b16 %v602
        %v618 = vunpack.c.l.b16 %v603
        %v619 = vunpack.c.l.b16 %v604
        %v620 = vunpack.c.l.b16 %v605
        %v621 = vpack.c.b16 %v618, %v617
        %v622 = vpack.c.b16 %v620, %v619
        %v626 = vsel %vm487, %v601, 0
        %628 = vmatprep.subr.bf16.mxu0 0
        %629 = vmatpush1.bf16.msra.mxu0 %v621
        %630 = vmatprep.subr.bf16.mxu0 0
        %631 = vmatpush1.bf16.msra.mxu0 %v622
        %632 = vmatprep.subr.bf16.mxu0 0
        %633 = vmatpush1.bf16.msra.mxu0 0
        %634 = vmatprep.subr.bf16.mxu0 0
        %635 = vmatpush1.bf16.msra.mxu0 0
        %636 = vmatprep.subr.bf16.mxu0 0
        %637 = vmatpush1.bf16.msra.mxu0 0
        %638 = vmatprep.subr.bf16.mxu0 0
        %639 = vmatpush1.bf16.msra.mxu0 0
        %640 = vmatprep.subr.bf16.mxu0 0
        %641 = vmatpush1.bf16.msra.mxu0 0
        %642 = vmatprep.subr.bf16.mxu0 0
        %643 = vmatpush1.bf16.msra.mxu0 0
        %644 = vmatprep.subr.bf16.mxu0 0
        %645 = vmatpush1.bf16.msra.mxu0 0
        %646 = vmatprep.subr.bf16.mxu0 0
        %647 = vmatpush1.bf16.msra.mxu0 0
        %648 = vmatprep.subr.bf16.mxu0 0
        %649 = vmatpush1.bf16.msra.mxu0 0
        %650 = vmatprep.subr.bf16.mxu0 0
        %651 = vmatpush1.bf16.msra.mxu0 0
        %652 = vmatprep.subr.bf16.mxu0 0
        %653 = vmatpush1.bf16.msra.mxu0 0
        %654 = vmatprep.subr.bf16.mxu0 0
        %655 = vmatpush1.bf16.msra.mxu0 0
        %656 = vmatprep.subr.bf16.mxu0 0
        %657 = vmatpush1.bf16.msra.mxu0 0
        %658 = vmatprep.subr.bf16.mxu0 0
        %659 = vmatpush1.bf16.msra.mxu0 0
        %660 = vmatprep.mubr.bf16.mxu0 0
        %661 = vmatmul.mubr.bf16.gmra.mrb[0].mxu0 %v626
        %v662 = vpop.f32.mrb[0].mxu0
        %v663 = vadd.f32 %v611, %v662
        %v664 = vpop.f32.mrb[0].mxu0
        %v665 = vpop.f32.mrb[0].mxu0
        %v666 = vpop.f32.mrb[0].mxu0
        %667 = vdwg.mxu0
        %v668 = vpack.c.bf16 %v663, %v663
        %vm669 = vcmask 60416
        %670 = vst.msk [vmem:[%s468] sm:$0xf] %vm669, %v584
        %671 = vst.msk [vmem:[%s475] sm:$0xf] %vm669, %v668
        %v673 = vunpack.c.l.b16 %v668
        %v674 = vpack.c.b16 %v673, %v673
        %675 = vrot.lane.b32.xlu0 %v674, 96
        %v676 = vpop.permute.xlu0 %675
        %678 = vst.msk [vmem:[%s482] sm:$0xf] %vm669, %v676
        %v680 = vunpack.c.l.b16 %v584
        %v681 = vpack.c.b16 %v680, %v680
        %682 = vrot.lane.b32.xlu0 %v681, 120
        %v683 = vpop.permute.xlu0 %682
        %s685 = scalar_lea.vmem %s468, 4 [#allocation10]
        %686 = vst.msk [vmem:[%s685] sm:$0xf] %vm669, %v683
        %687 = vrot.lane.b32.xlu0 %v674, 120
        %v688 = vpop.permute.xlu0 %687
        %s690 = scalar_lea.vmem %s475, 4 [#allocation11]
        %691 = vst.msk [vmem:[%s690] sm:$0xf] %vm669, %v688
        %692 = vrot.lane.b32.xlu0 %v674, 88
        %v693 = vpop.permute.xlu0 %692
        %s695 = scalar_lea.vmem %s482, 4 [#allocation13]
        %696 = vst.msk [vmem:[%s695] sm:$0xf] %vm669, %v693
        %697 = vrot.lane.b32.xlu0 %v681, 112
        %v698 = vpop.permute.xlu0 %697
        %s700 = scalar_lea.vmem %s468, 8 [#allocation10]
        %701 = vst.msk [vmem:[%s700] sm:$0xf] %vm669, %v698
        %702 = vrot.lane.b32.xlu0 %v674, 112
        %v703 = vpop.permute.xlu0 %702
        %s705 = scalar_lea.vmem %s475, 8 [#allocation11]
        %706 = vst.msk [vmem:[%s705] sm:$0xf] %vm669, %v703
        %707 = vrot.lane.b32.xlu0 %v674, 80
        %v708 = vpop.permute.xlu0 %707
        %s710 = scalar_lea.vmem %s482, 8 [#allocation13]
        %711 = vst.msk [vmem:[%s710] sm:$0xf] %vm669, %v708
        %712 = vrot.lane.b32.xlu0 %v681, 104
        %v713 = vpop.permute.xlu0 %712
        %s715 = scalar_lea.vmem %s468, 12 [#allocation10]
        %716 = vst.msk [vmem:[%s715] sm:$0xf] %vm669, %v713
        %717 = vrot.lane.b32.xlu0 %v674, 104
        %v718 = vpop.permute.xlu0 %717
        %s720 = scalar_lea.vmem %s475, 12 [#allocation11]
        %721 = vst.msk [vmem:[%s720] sm:$0xf] %vm669, %v718
        %722 = vrot.lane.b32.xlu0 %v674, 72
        %v723 = vpop.permute.xlu0 %722
        %s725 = scalar_lea.vmem %s482, 12 [#allocation13]
        %726 = vst.msk [vmem:[%s725] sm:$0xf] %vm669, %v723
        %s727 = sand.u32 %s239, 1
        %s728 = scalar_lea.sflag [#allocation4], %s727
        %s729 = sand.u32 %s239, 1
        %s730 = smul.addr %s729, 16
        %s731 = scalar_lea.vmem [#allocation10], %s730
        %s732 = sand.u32 %s35, 1
        %s733 = scalar_lea.sflag [#allocation12], %s732
        %s734 = sand.u32 %s267, 1
        %s735 = smul.addr %s734, 16
        %s736 = scalar_lea.vmem [#allocation11], %s735
        %s737 = sand.u32 %s35, 1
        %s738 = scalar_lea.sflag [#allocation12], %s737
        %s739 = sand.u32 %s295, 1
        %s740 = smul.addr %s739, 16
        %s741 = scalar_lea.vmem [#allocation13], %s740
        // Predicated region
        $region69: #{tpu_custom_call.1} parent=51 // pred_check
          %p742 = pneg %p249
        $region70: #{tpu_custom_call.1} parent=51 // pred_check_branch
          %744 = sbr.rel (%p742) target = $region72
        $region71: #{tpu_custom_call.1} parent=51 // pred_region
          %s746 = ssub.s32 256, 256
          %747 = vsyncadd %s728, %s746
          %s748 = smul.addr %s39, 4
          %s749 = sadd.s32 %s40, %s748
          %s750 = smul.addr %s749, 64
          %s751 = scalar_lea.hbm %s8, %s750
          %s752 = sshll.u32 %s731, 4
          %s753 = int_to_ptr.vmem [resolvable:$true] %s752
          %758 = dma.vmem_to_hbm [thread:$0]  %s753, 256, %s751, %s728, 64, 64, 4
        $region72: #{tpu_custom_call.1} parent=51 // pred_fallthru
          _
        // Predicated region
        $region73: #{tpu_custom_call.1} parent=51 // pred_check
          %p759 = pneg %p277
        $region74: #{tpu_custom_call.1} parent=51 // pred_check_branch
          %761 = sbr.rel (%p759) target = $region76
        $region75: #{tpu_custom_call.1} parent=51 // pred_region
          %s763 = ssub.s32 256, 256
          %764 = vsyncadd %s733, %s763
          %s765 = smul.addr %s39, 4
          %s766 = sadd.s32 %s40, %s765
          %s767 = smul.addr %s766, 64
          %s768 = scalar_lea.hbm %s9, %s767
          %s769 = sshll.u32 %s736, 4
          %s770 = int_to_ptr.vmem [resolvable:$true] %s769
          %775 = dma.vmem_to_hbm [thread:$0]  %s770, 256, %s768, %s733, 64, 64, 4
        $region76: #{tpu_custom_call.1} parent=51 // pred_fallthru
          _
        // Predicated region
        $region77: #{tpu_custom_call.1} parent=51 // pred_check
          %p776 = pneg %p305
        $region78: #{tpu_custom_call.1} parent=51 // pred_check_branch
          %778 = sbr.rel (%p776) target = $region80
        $region79: #{tpu_custom_call.1} parent=51 // pred_region
          %s780 = ssub.s32 256, 256
          %781 = vsyncadd %s738, %s780
          %s782 = smul.addr %s39, 4
          %s783 = sadd.s32 %s40, %s782
          %s784 = smul.addr %s783, 64
          %s785 = scalar_lea.hbm %s10, %s784
          %s786 = sshll.u32 %s741, 4
          %s787 = int_to_ptr.vmem [resolvable:$true] %s786
          %792 = dma.vmem_to_hbm [thread:$0]  %s787, 256, %s785, %s738, 64, 64, 4
        $region80: #{tpu_custom_call.1} parent=51 // pred_fallthru
          _
      $region52: #{tpu_custom_call.1} parent=5 // pred_fallthru
        _
      %p793 = scmp.le.s32.totalorder 2, %s30
      // Predicated region
      $region81: #{tpu_custom_call.1} parent=5 // pred_check
        %p794 = pneg %p793
      $region82: #{tpu_custom_call.1} parent=5 // pred_check_branch
        %796 = sbr.rel (%p794) target = $region84
      $region83: #{tpu_custom_call.1} parent=5 // pred_region
        %s797 = ssub.s32 %s30, 2
        // Predicated region
        $region85: #{tpu_custom_call.1} parent=83 // pred_check
          %p798 = pneg %p255
        $region86: #{tpu_custom_call.1} parent=83 // pred_check_branch
          %800 = sbr.rel (%p798) target = $region88
        $region87: #{tpu_custom_call.1} parent=83 // pred_region
          %s801 = sand.u32 %s240, 1
          %s802 = scalar_lea.sflag [#allocation4], %s801
          %s803 = sand.u32 %s240, 1
          %s804 = smul.addr %s803, 16
          %s805 = scalar_lea.vmem [#allocation10], %s804
          %806 = dma.done %s802, 256
        $region88: #{tpu_custom_call.1} parent=83 // pred_fallthru
          _
        // Predicated region
        $region89: #{tpu_custom_call.1} parent=83 // pred_check
          %p807 = pneg %p283
        $region90: #{tpu_custom_call.1} parent=83 // pred_check_branch
          %809 = sbr.rel (%p807) target = $region92
        $region91: #{tpu_custom_call.1} parent=83 // pred_region
          %s810 = sand.u32 %s36, 1
          %s811 = scalar_lea.sflag [#allocation12], %s810
          %s812 = sand.u32 %s268, 1
          %s813 = smul.addr %s812, 16
          %s814 = scalar_lea.vmem [#allocation11], %s813
          %815 = dma.done %s811, 256
        $region92: #{tpu_custom_call.1} parent=83 // pred_fallthru
          _
        // Predicated region
        $region93: #{tpu_custom_call.1} parent=83 // pred_check
          %p816 = pneg %p311
        $region94: #{tpu_custom_call.1} parent=83 // pred_check_branch
          %818 = sbr.rel (%p816) target = $region96
        $region95: #{tpu_custom_call.1} parent=83 // pred_region
          %s819 = sand.u32 %s36, 1
          %s820 = scalar_lea.sflag [#allocation12], %s819
          %s821 = sand.u32 %s296, 1
          %s822 = smul.addr %s821, 16
          %s823 = scalar_lea.vmem [#allocation13], %s822
          %824 = dma.done %s820, 256
        $region96: #{tpu_custom_call.1} parent=83 // pred_fallthru
          _
      $region84: #{tpu_custom_call.1} parent=5 // pred_fallthru
        _
    $region6: #{tpu_custom_call.1} parent=1 // loop_footer
      %s34 = sadd.s32 1, %s30
    $region7: #{tpu_custom_call.1} parent=1 // loop_footer_branch
      %29 = sbr.rel target = $region3
    $region8: #{tpu_custom_call.1} parent=1 // loop_exit
      _
    %825 = vsyncpa [#allocation3], 1
    %s826 = scalar_lea.sflag [#allocation3], 1
    %827 = vsyncpa %s826, 1
    %828 = vsyncpa [#allocation6], 1
    %s829 = scalar_lea.sflag [#allocation6], 1
    %830 = vsyncpa %s829, 1
    %831 = vsyncpa [#allocation9], 1
    %832 = vsyncpa [#allocation4], 1
    %s833 = scalar_lea.sflag [#allocation4], 1
    %834 = vsyncpa %s833, 1
    %835 = vsyncpa [#allocation12], 1
    %s836 = scalar_lea.sflag [#allocation12], 1
    %837 = vsyncpa %s836, 1

// kernel: tpu_custom_call.1
$region0: #{tpu_custom_call.1}
  #allocation0 [shape = 'u32[]', space=smem, size = 0x4, offset = 0x4, fixed_abs, tag = 'smem constant byte address 0x4 - core index']
  #allocation1 [shape = 'u32[144,128]{1,0:T(1,128)}', space=vmem, size = 0x12000, scoped, tag = 'internal scratch']
  %s0 = inlined_call_operand.hbm [shape: f32[2,8,32], index: 0, kind: input, shape index: {}]
  %s1 = inlined_call_operand.hbm [shape: f32[2,8,32], index: 1, kind: input, shape index: {}]
  %s2 = inlined_call_operand.hbm [shape: bf16[32,32], index: 2, kind: input, shape index: {}]
  %s3 = inlined_call_operand.vmem [shape: f32[1,32], index: 3, kind: input, shape index: {}]
  %s4 = inlined_call_operand.hbm [shape: bf16[32,64], index: 4, kind: input, shape index: {}]
  %s5 = inlined_call_operand.vmem [shape: f32[1,64], index: 5, kind: input, shape index: {}]
  %s6 = inlined_call_operand.vmem [shape: f32[1,32], index: 6, kind: input, shape index: {}]
  %s7 = inlined_call_operand.vmem [shape: f32[1,32], index: 7, kind: input, shape index: {}]
  %s8 = inlined_call_operand.hbm [shape: bf16[2,4,8,8], index: 8, kind: output, shape index: {0}]
  %s9 = inlined_call_operand.hbm [shape: bf16[2,4,8,8], index: 9, kind: output, shape index: {1}]
  %s10 = inlined_call_operand.hbm [shape: bf16[2,4,8,8], index: 10, kind: output, shape index: {2}]
  %11 = xla_tuple %s8, %s9, %s10
  %s12 = sld [smem:[#allocation0]]
  $region97: #{tpu_custom_call.1} parent=0
    _
  %s14 = ssub.s32 1, %s12
  %s15 = scalar_select 0, %s14, %s12
  $region1: #{tpu_custom_call.1} parent=0
    #allocation2 [shape = 'u8[8192]{0}', space=vmem, size = 0x2000, scoped, tag = 'input window, operand 0']
    #allocation3 [shape = 's32[2]{0}', space=sflag, size = 0x8, scoped, tag = 'scoped memory for tpu_custom_call.1']
    #allocation4 [shape = 's32[2]{0}', space=sflag, size = 0x8, scoped, tag = 'scoped memory for tpu_custom_call.1']
    #allocation5 [shape = 'u8[8192]{0}', space=vmem, size = 0x2000, scoped, tag = 'input window, operand 1']
    #allocation6 [shape = 's32[2]{0}', space=sflag, size = 0x8, scoped, tag = 'scoped memory for tpu_custom_call.1']
    #allocation7 [shape = 'u8[8192]{0}', space=vmem, size = 0x2000, scoped, tag = 'input window, operand 2, single buffered']
    #allocation8 [shape = 'u8[8192]{0}', space=vmem, size = 0x2000, scoped, tag = 'input window, operand 4, single buffered']
    #allocation9 [shape = 's32[1]{0}', space=sflag, size = 0x4, scoped, tag = 'scoped memory for tpu_custom_call.1']
    #allocation10 [shape = 'u8[16384]{0}', space=vmem, size = 0x4000, scoped, tag = 'output window, operand 0']
    #allocation11 [shape = 'u8[16384]{0}', space=vmem, size = 0x4000, scoped, tag = 'output window, operand 1']
    #allocation12 [shape = 's32[2]{0}', space=sflag, size = 0x8, scoped, tag = 'scoped memory for tpu_custom_call.1']
    #allocation13 [shape = 'u8[16384]{0}', space=vmem, size = 0x4000, scoped, tag = 'output window, operand 2']
    %16 = vsyncpa [#allocation3], 0
    %s17 = scalar_lea.sflag [#allocation3], 1
    %18 = vsyncpa %s17, 0
    %19 = vsyncpa [#allocation6], 0
    %s20 = scalar_lea.sflag [#allocation6], 1
    %21 = vsyncpa %s20, 0
    %22 = vsyncpa [#allocation9], 0
    %23 = vsyncpa [#allocation4], 0
    %s24 = scalar_lea.sflag [#allocation4], 1
    %25 = vsyncpa %s24, 0
    %26 = vsyncpa [#allocation12], 0
    %s27 = scalar_lea.sflag [#allocation12], 1
    %28 = vsyncpa %s27, 0
    loop: start=0, step=1, limit=4
    $region2: #{tpu_custom_call.1} parent=1 // loop_pre_header
      _
    $region3: #{tpu_custom_call.1} parent=1 // loop_header
      %s30 = sphi 0, %s34
      %p31 = scmp.ge.s32.totalorder %s30, 4
      %s37 = sphi 0, %s49
      %s38 = sphi 0, %s45
      %s39 = sphi 0, %s37
      %s40 = sphi 0, %s38
      %s41 = sphi 0, %s39
      %s42 = sphi 0, %s40
      %s54 = sphi 0, %s56
      %s57 = sphi 0, %s54
      %s58 = sphi 0, %s57
      %s74 = sphi 0, %s58
      %s82 = sphi 0, %s84
      %s85 = sphi 0, %s82
      %s86 = sphi 0, %s85
      %s102 = sphi 0, %s86
      %s106 = sphi 0, %s106
      %s108 = sphi 0, %s106
      %s109 = sphi 0, %s108
      %s123 = sphi 0, %s109
      %s127 = sphi 0, %s127
      %s129 = sphi 0, %s127
      %s130 = sphi 0, %s129
      %s144 = sphi 0, %s130
      %s148 = sphi 0, %s148
      %s150 = sphi 0, %s148
      %s151 = sphi 0, %s150
      %s165 = sphi 0, %s151
      %s169 = sphi 0, %s169
      %s171 = sphi 0, %s169
      %s172 = sphi 0, %s171
      %s186 = sphi 0, %s172
      %s190 = sphi 0, %s190
      %s192 = sphi 0, %s190
      %s193 = sphi 0, %s192
      %s207 = sphi 0, %s193
      %s211 = sphi 0, %s211
      %s213 = sphi 0, %s211
      %s214 = sphi 0, %s213
      %s228 = sphi 0, %s214
      %s236 = sphi 0, %s238
      %s239 = sphi 0, %s236
      %s240 = sphi 0, %s239
      %s256 = sphi 0, %s240
      %s264 = sphi 0, %s266
      %s267 = sphi 0, %s264
      %s268 = sphi 0, %s267
      %s284 = sphi 0, %s268
      %s292 = sphi 0, %s294
      %s295 = sphi 0, %s292
      %s296 = sphi 0, %s295
      %s312 = sphi 0, %s296
    $region4: #{tpu_custom_call.1} parent=1 // loop_header_branch
      %33 = sbr.rel (%p31) target = $region8
    $region5: #{tpu_custom_call.1} parent=1 // loop_body
      %s35 = ssub.s32 %s30, 1
      %s36 = ssub.s32 %s30, 2
      %s43 = sadd.s32 1, %s38
      %p44 = scmp.ge.s32.totalorder %s43, 1
      %s45 = scalar_select %p44, 0, %s43
      %s46 = sadd.s32 1, %s37
      %s47 = scalar_select %p44, %s46, %s37
      %p48 = scmp.ge.s32.totalorder %s47, 2
      %s49 = scalar_select %p48, 0, %s47
      %s50 = ssub.s32 %s37, %s49
      %s51 = ssub.s32 %s38, %s45
      %s52 = sor.u32 %s50, %s51
      %p53 = scmp.eq.s32.totalorder %s52, 0
      %s55 = sadd.s32 %s54, 1
      %s56 = scalar_select %p53, %s54, %s55
      %p59 = pneg %p53
      %p60 = scmp.eq.s32.totalorder %s30, 1
      %p61 = por %p59, %p60
      %p62 = scmp.ne.s32.totalorder %s54, %s57
      %p63 = scmp.eq.s32.totalorder %s30, 0
      %p64 = por %p62, %p63
      %p65 = scmp.ne.s32.totalorder %s54, %s57
      %p66 = scmp.eq.s32.totalorder %s35, 1
      %p67 = por %p65, %p66
      %p68 = scmp.ne.s32.totalorder %s57, %s58
      %p69 = scmp.eq.s32.totalorder %s35, 0
      %p70 = por %p68, %p69
      %p71 = scmp.ne.s32.totalorder %s57, %s58
      %p72 = scmp.eq.s32.totalorder %s36, 1
      %p73 = por %p71, %p72
      %p75 = scmp.ne.s32.totalorder %s58, %s74
      %p76 = scmp.eq.s32.totalorder %s36, 0
      %p77 = por %p75, %p76
      %s78 = ssub.s32 %s37, %s49
      %s79 = ssub.s32 %s38, %s45
      %s80 = sor.u32 %s78, %s79
      %p81 = scmp.eq.s32.totalorder %s80, 0
      %s83 = sadd.s32 %s82, 1
      %s84 = scalar_select %p81, %s82, %s83
      %p87 = pneg %p81
      %p88 = scmp.eq.s32.totalorder %s30, 1
      %p89 = por %p87, %p88
      %p90 = scmp.ne.s32.totalorder %s82, %s85
      %p91 = scmp.eq.s32.totalorder %s30, 0
      %p92 = por %p90, %p91
      %p93 = scmp.ne.s32.totalorder %s82, %s85
      %p94 = scmp.eq.s32.totalorder %s35, 1
      %p95 = por %p93, %p94
      %p96 = scmp.ne.s32.totalorder %s85, %s86
      %p97 = scmp.eq.s32.totalorder %s35, 0
      %p98 = por %p96, %p97
      %p99 = scmp.ne.s32.totalorder %s85, %s86
      %p100 = scmp.eq.s32.totalorder %s36, 1
      %p101 = por %p99, %p100
      %p103 = scmp.ne.s32.totalorder %s86, %s102
      %p104 = scmp.eq.s32.totalorder %s36, 0
      %p105 = por %p103, %p104
      %s107 = sadd.s32 %s106, 1
      %p110 = scmp.eq.s32.totalorder %s30, 1
      %p111 = scmp.ne.s32.totalorder %s106, %s108
      %p112 = scmp.eq.s32.totalorder %s30, 0
      %p113 = por %p111, %p112
      %p114 = scmp.ne.s32.totalorder %s106, %s108
      %p115 = scmp.eq.s32.totalorder %s35, 1
      %p116 = por %p114, %p115
      %p117 = scmp.ne.s32.totalorder %s108, %s109
      %p118 = scmp.eq.s32.totalorder %s35, 0
      %p119 = por %p117, %p118
      %p120 = scmp.ne.s32.totalorder %s108, %s109
      %p121 = scmp.eq.s32.totalorder %s36, 1
      %p122 = por %p120, %p121
      %p124 = scmp.ne.s32.totalorder %s109, %s123
      %p125 = scmp.eq.s32.totalorder %s36, 0
      %p126 = por %p124, %p125
      %s128 = sadd.s32 %s127, 1
      %p131 = scmp.eq.s32.totalorder %s30, 1
      %p132 = scmp.ne.s32.totalorder %s127, %s129
      %p133 = scmp.eq.s32.totalorder %s30, 0
      %p134 = por %p132, %p133
      %p135 = scmp.ne.s32.totalorder %s127, %s129
      %p136 = scmp.eq.s32.totalorder %s35, 1
      %p137 = por %p135, %p136
      %p138 = scmp.ne.s32.totalorder %s129, %s130
      %p139 = scmp.eq.s32.totalorder %s35, 0
      %p140 = por %p138, %p139
      %p141 = scmp.ne.s32.totalorder %s129, %s130
      %p142 = scmp.eq.s32.totalorder %s36, 1
      %p143 = por %p141, %p142
      %p145 = scmp.ne.s32.totalorder %s130, %s144
      %p146 = scmp.eq.s32.totalorder %s36, 0
      %p147 = por %p145, %p146
      %s149 = sadd.s32 %s148, 1
      %p152 = scmp.eq.s32.totalorder %s30, 1
      %p153 = scmp.ne.s32.totalorder %s148, %s150
      %p154 = scmp.eq.s32.totalorder %s30, 0
      %p155 = por %p153, %p154
      %p156 = scmp.ne.s32.totalorder %s148, %s150
      %p157 = scmp.eq.s32.totalorder %s35, 1
      %p158 = por %p156, %p157
      %p159 = scmp.ne.s32.totalorder %s150, %s151
      %p160 = scmp.eq.s32.totalorder %s35, 0
      %p161 = por %p159, %p160
      %p162 = scmp.ne.s32.totalorder %s150, %s151
      %p163 = scmp.eq.s32.totalorder %s36, 1
      %p164 = por %p162, %p163
      %p166 = scmp.ne.s32.totalorder %s151, %s165
      %p167 = scmp.eq.s32.totalorder %s36, 0
      %p168 = por %p166, %p167
      %s170 = sadd.s32 %s169, 1
      %p173 = scmp.eq.s32.totalorder %s30, 1
      %p174 = scmp.ne.s32.totalorder %s169, %s171
      %p175 = scmp.eq.s32.totalorder %s30, 0
      %p176 = por %p174, %p175
      %p177 = scmp.ne.s32.totalorder %s169, %s171
      %p178 = scmp.eq.s32.totalorder %s35, 1
      %p179 = por %p177, %p178
      %p180 = scmp.ne.s32.totalorder %s171, %s172
      %p181 = scmp.eq.s32.totalorder %s35, 0
      %p182 = por %p180, %p181
      %p183 = scmp.ne.s32.totalorder %s171, %s172
      %p184 = scmp.eq.s32.totalorder %s36, 1
      %p185 = por %p183, %p184
      %p187 = scmp.ne.s32.totalorder %s172, %s186
      %p188 = scmp.eq.s32.totalorder %s36, 0
      %p189 = por %p187, %p188
      %s191 = sadd.s32 %s190, 1
      %p194 = scmp.eq.s32.totalorder %s30, 1
      %p195 = scmp.ne.s32.totalorder %s190, %s192
      %p196 = scmp.eq.s32.totalorder %s30, 0
      %p197 = por %p195, %p196
      %p198 = scmp.ne.s32.totalorder %s190, %s192
      %p199 = scmp.eq.s32.totalorder %s35, 1
      %p200 = por %p198, %p199
      %p201 = scmp.ne.s32.totalorder %s192, %s193
      %p202 = scmp.eq.s32.totalorder %s35, 0
      %p203 = por %p201, %p202
      %p204 = scmp.ne.s32.totalorder %s192, %s193
      %p205 = scmp.eq.s32.totalorder %s36, 1
      %p206 = por %p204, %p205
      %p208 = scmp.ne.s32.totalorder %s193, %s207
      %p209 = scmp.eq.s32.totalorder %s36, 0
      %p210 = por %p208, %p209
      %s212 = sadd.s32 %s211, 1
      %p215 = scmp.eq.s32.totalorder %s30, 1
      %p216 = scmp.ne.s32.totalorder %s211, %s213
      %p217 = scmp.eq.s32.totalorder %s30, 0
      %p218 = por %p216, %p217
      %p219 = scmp.ne.s32.totalorder %s211, %s213
      %p220 = scmp.eq.s32.totalorder %s35, 1
      %p221 = por %p219, %p220
      %p222 = scmp.ne.s32.totalorder %s213, %s214
      %p223 = scmp.eq.s32.totalorder %s35, 0
      %p224 = por %p222, %p223
      %p225 = scmp.ne.s32.totalorder %s213, %s214
      %p226 = scmp.eq.s32.totalorder %s36, 1
      %p227 = por %p225, %p226
      %p229 = scmp.ne.s32.totalorder %s214, %s228
      %p230 = scmp.eq.s32.totalorder %s36, 0
      %p231 = por %p229, %p230
      %s232 = ssub.s32 %s37, %s49
      %s233 = ssub.s32 %s38, %s45
      %s234 = sor.u32 %s232, %s233
      %p235 = scmp.eq.s32.totalorder %s234, 0
      %s237 = sadd.s32 %s236, 1
      %s238 = scalar_select %p235, %s236, %s237
      %p241 = pneg %p235
      %p242 = scmp.eq.s32.totalorder %s30, 1
      %p243 = por %p241, %p242
      %p244 = scmp.ne.s32.totalorder %s236, %s239
      %p245 = scmp.eq.s32.totalorder %s30, 0
      %p246 = por %p244, %p245
      %p247 = scmp.ne.s32.totalorder %s236, %s239
      %p248 = scmp.eq.s32.totalorder %s35, 1
      %p249 = por %p247, %p248
      %p250 = scmp.ne.s32.totalorder %s239, %s240
      %p251 = scmp.eq.s32.totalorder %s35, 0
      %p252 = por %p250, %p251
      %p253 = scmp.ne.s32.totalorder %s239, %s240
      %p254 = scmp.eq.s32.totalorder %s36, 1
      %p255 = por %p253, %p254
      %p257 = scmp.ne.s32.totalorder %s240, %s256
      %p258 = scmp.eq.s32.totalorder %s36, 0
      %p259 = por %p257, %p258
      %s260 = ssub.s32 %s37, %s49
      %s261 = ssub.s32 %s38, %s45
      %s262 = sor.u32 %s260, %s261
      %p263 = scmp.eq.s32.totalorder %s262, 0
      %s265 = sadd.s32 %s264, 1
      %s266 = scalar_select %p263, %s264, %s265
      %p269 = pneg %p263
      %p270 = scmp.eq.s32.totalorder %s30, 1
      %p271 = por %p269, %p270
      %p272 = scmp.ne.s32.totalorder %s264, %s267
      %p273 = scmp.eq.s32.totalorder %s30, 0
      %p274 = por %p272, %p273
      %p275 = scmp.ne.s32.totalorder %s264, %s267
      %p276 = scmp.eq.s32.totalorder %s35, 1
      %p277 = por %p275, %p276
      %p278 = scmp.ne.s32.totalorder %s267, %s268
      %p279 = scmp.eq.s32.totalorder %s35, 0
      %p280 = por %p278, %p279
      %p281 = scmp.ne.s32.totalorder %s267, %s268
      %p282 = scmp.eq.s32.totalorder %s36, 1
      %p283 = por %p281, %p282
      %p285 = scmp.ne.s32.totalorder %s268, %s284
      %p286 = scmp.eq.s32.totalorder %s36, 0
      %p287 = por %p285, %p286
      %s288 = ssub.s32 %s37, %s49
      %s289 = ssub.s32 %s38, %s45
      %s290 = sor.u32 %s288, %s289
      %p291 = scmp.eq.s32.totalorder %s290, 0
      %s293 = sadd.s32 %s292, 1
      %s294 = scalar_select %p291, %s292, %s293
      %p297 = pneg %p291
      %p298 = scmp.eq.s32.totalorder %s30, 1
      %p299 = por %p297, %p298
      %p300 = scmp.ne.s32.totalorder %s292, %s295
      %p301 = scmp.eq.s32.totalorder %s30, 0
      %p302 = por %p300, %p301
      %p303 = scmp.ne.s32.totalorder %s292, %s295
      %p304 = scmp.eq.s32.totalorder %s35, 1
      %p305 = por %p303, %p304
      %p306 = scmp.ne.s32.totalorder %s295, %s296
      %p307 = scmp.eq.s32.totalorder %s35, 0
      %p308 = por %p306, %p307
      %p309 = scmp.ne.s32.totalorder %s295, %s296
      %p310 = scmp.eq.s32.totalorder %s36, 1
      %p311 = por %p309, %p310
      %p313 = scmp.ne.s32.totalorder %s296, %s312
      %p314 = scmp.eq.s32.totalorder %s36, 0
      %p315 = por %p313, %p314
      %p316 = scmp.le.s32.totalorder 1, %s30
      %p317 = scmp.lt.s32.totalorder %s30, 3
      %p318 = pnand %p316, %p317
      %p319 = pneg %p318
      // Predicated region
      $region9: #{tpu_custom_call.1} parent=5 // pred_check
        _
      $region10: #{tpu_custom_call.1} parent=5 // pred_check_branch
        %321 = sbr.rel (%p318) target = $region12
      $region11: #{tpu_custom_call.1} parent=5 // pred_region
        %s322 = ssub.s32 %s30, 1
        // Predicated region
        $region13: #{tpu_custom_call.1} parent=11 // pred_check
          %p323 = pneg %p119
        $region14: #{tpu_custom_call.1} parent=11 // pred_check_branch
          %325 = sbr.rel (%p323) target = $region16
        $region15: #{tpu_custom_call.1} parent=11 // pred_region
          %s327 = ssub.s32 256, 256
          %328 = vsyncadd [#allocation6], %s327
          %s329 = sshll.u32 [#allocation7], 4
          %s330 = int_to_ptr.vmem [resolvable:$true] %s329
          %335 = dma.hbm_to_vmem [thread:$0]  %s2, 256, %s330, [#allocation6], 64, 64, 4
        $region16: #{tpu_custom_call.1} parent=11 // pred_fallthru
          _
        // Predicated region
        $region17: #{tpu_custom_call.1} parent=11 // pred_check
          %p336 = pneg %p140
        $region18: #{tpu_custom_call.1} parent=11 // pred_check_branch
          %338 = sbr.rel (%p336) target = $region20
        $region19: #{tpu_custom_call.1} parent=11 // pred_region
          _
        $region20: #{tpu_custom_call.1} parent=11 // pred_fallthru
          _
        // Predicated region
        $region21: #{tpu_custom_call.1} parent=11 // pred_check
          %p339 = pneg %p161
        $region22: #{tpu_custom_call.1} parent=11 // pred_check_branch
          %341 = sbr.rel (%p339) target = $region24
        $region23: #{tpu_custom_call.1} parent=11 // pred_region
          %s343 = ssub.s32 256, 256
          %344 = vsyncadd [#allocation9], %s343
          %s345 = sshll.u32 [#allocation8], 4
          %s346 = int_to_ptr.vmem [resolvable:$true] %s345
          %351 = dma.hbm_to_vmem [thread:$0]  %s4, 256, %s346, [#allocation9], 64, 64, 4
        $region24: #{tpu_custom_call.1} parent=11 // pred_fallthru
          _
        // Predicated region
        $region25: #{tpu_custom_call.1} parent=11 // pred_check
          %p352 = pneg %p182
        $region26: #{tpu_custom_call.1} parent=11 // pred_check_branch
          %354 = sbr.rel (%p352) target = $region28
        $region27: #{tpu_custom_call.1} parent=11 // pred_region
          _
        $region28: #{tpu_custom_call.1} parent=11 // pred_fallthru
          _
        // Predicated region
        $region29: #{tpu_custom_call.1} parent=11 // pred_check
          %p355 = pneg %p203
        $region30: #{tpu_custom_call.1} parent=11 // pred_check_branch
          %357 = sbr.rel (%p355) target = $region32
        $region31: #{tpu_custom_call.1} parent=11 // pred_region
          _
        $region32: #{tpu_custom_call.1} parent=11 // pred_fallthru
          _
        // Predicated region
        $region33: #{tpu_custom_call.1} parent=11 // pred_check
          %p358 = pneg %p224
        $region34: #{tpu_custom_call.1} parent=11 // pred_check_branch
          %360 = sbr.rel (%p358) target = $region36
        $region35: #{tpu_custom_call.1} parent=11 // pred_region
          _
        $region36: #{tpu_custom_call.1} parent=11 // pred_fallthru
          _
      $region12: #{tpu_custom_call.1} parent=5 // pred_fallthru
        _
      %p361 = scmp.lt.s32.totalorder %s30, 2
      // Predicated region
      $region37: #{tpu_custom_call.1} parent=5 // pred_check
        %p362 = pneg %p361
      $region38: #{tpu_custom_call.1} parent=5 // pred_check_branch
        %364 = sbr.rel (%p362) target = $region40
      $region39: #{tpu_custom_call.1} parent=5 // pred_region
        // Predicated region
        $region41: #{tpu_custom_call.1} parent=39 // pred_check
          %p365 = pneg %p64
        $region42: #{tpu_custom_call.1} parent=39 // pred_check_branch
          %367 = sbr.rel (%p365) target = $region44
        $region43: #{tpu_custom_call.1} parent=39 // pred_region
          %s368 = sand.u32 %s54, 1
          %s369 = scalar_lea.sflag [#allocation3], %s368
          %s370 = sand.u32 %s54, 1
          %s371 = smul.addr %s370, 8
          %s372 = scalar_lea.vmem [#allocation2], %s371
          %s374 = ssub.s32 128, 128
          %375 = vsyncadd %s369, %s374
          %s376 = sadd.s32 %s38, %s37
          %s377 = smul.addr %s376, 128
          %s378 = scalar_lea.hbm %s0, %s377
          %s380 = sshll.u32 %s372, 4
          %s381 = int_to_ptr.vmem [resolvable:$true] %s380
          %383 = dma.hbm_to_vmem [thread:$0]  %s378, 128, %s381, %s369
        $region44: #{tpu_custom_call.1} parent=39 // pred_fallthru
          _
        // Predicated region
        $region45: #{tpu_custom_call.1} parent=39 // pred_check
          %p384 = pneg %p92
        $region46: #{tpu_custom_call.1} parent=39 // pred_check_branch
          %386 = sbr.rel (%p384) target = $region48
        $region47: #{tpu_custom_call.1} parent=39 // pred_region
          %s387 = sand.u32 %s30, 1
          %s388 = scalar_lea.sflag [#allocation6], %s387
          %s389 = sand.u32 %s82, 1
          %s390 = smul.addr %s389, 8
          %s391 = scalar_lea.vmem [#allocation5], %s390
          %s393 = ssub.s32 128, 128
          %394 = vsyncadd %s388, %s393
          %s395 = sadd.s32 %s38, %s37
          %s396 = smul.addr %s395, 128
          %s397 = scalar_lea.hbm %s1, %s396
          %s399 = sshll.u32 %s391, 4
          %s400 = int_to_ptr.vmem [resolvable:$true] %s399
          %402 = dma.hbm_to_vmem [thread:$0]  %s397, 128, %s400, %s388
        $region48: #{tpu_custom_call.1} parent=39 // pred_fallthru
          _
      $region40: #{tpu_custom_call.1} parent=5 // pred_fallthru
        _
      %p403 = scmp.le.s32.totalorder 1, %s30
      %p404 = scmp.lt.s32.totalorder %s30, 3
      %p405 = pnand %p403, %p404
      %p406 = pneg %p405
      // Predicated region
      $region49: #{tpu_custom_call.1} parent=5 // pred_check
        _
      $region50: #{tpu_custom_call.1} parent=5 // pred_check_branch
        %408 = sbr.rel (%p405) target = $region52
      $region51: #{tpu_custom_call.1} parent=5 // pred_region
        %s409 = ssub.s32 %s30, 1
        %s410 = sand.u32 %s57, 1
        %s411 = scalar_lea.sflag [#allocation3], %s410
        %s412 = sand.u32 %s57, 1
        %s413 = smul.addr %s412, 8
        %s414 = scalar_lea.vmem [#allocation2], %s413
        // Predicated region
        $region53: #{tpu_custom_call.1} parent=51 // pred_check
          %p415 = pneg %p70
        $region54: #{tpu_custom_call.1} parent=51 // pred_check_branch
          %417 = sbr.rel (%p415) target = $region56
        $region55: #{tpu_custom_call.1} parent=51 // pred_region
          %418 = dma.done %s411, 128
        $region56: #{tpu_custom_call.1} parent=51 // pred_fallthru
          _
        %s419 = sand.u32 %s35, 1
        %s420 = scalar_lea.sflag [#allocation6], %s419
        %s421 = sand.u32 %s85, 1
        %s422 = smul.addr %s421, 8
        %s423 = scalar_lea.vmem [#allocation5], %s422
        // Predicated region
        $region57: #{tpu_custom_call.1} parent=51 // pred_check
          %p424 = pneg %p98
        $region58: #{tpu_custom_call.1} parent=51 // pred_check_branch
          %426 = sbr.rel (%p424) target = $region60
        $region59: #{tpu_custom_call.1} parent=51 // pred_region
          %427 = dma.done %s420, 128
        $region60: #{tpu_custom_call.1} parent=51 // pred_fallthru
          _
        // Predicated region
        $region61: #{tpu_custom_call.1} parent=51 // pred_check
          %p428 = pneg %p119
        $region62: #{tpu_custom_call.1} parent=51 // pred_check_branch
          %430 = sbr.rel (%p428) target = $region64
        $region63: #{tpu_custom_call.1} parent=51 // pred_region
          %431 = dma.done [#allocation6], 256
        $region64: #{tpu_custom_call.1} parent=51 // pred_fallthru
          _
        // Predicated region
        $region65: #{tpu_custom_call.1} parent=51 // pred_check
          %p432 = pneg %p161
        $region66: #{tpu_custom_call.1} parent=51 // pred_check_branch
          %434 = sbr.rel (%p432) target = $region68
        $region67: #{tpu_custom_call.1} parent=51 // pred_region
          %435 = dma.done [#allocation9], 256
        $region68: #{tpu_custom_call.1} parent=51 // pred_fallthru
          _
        %s436 = sand.u32 %s57, 1
        %s437 = scalar_lea.sflag [#allocation3], %s436
        %s438 = sand.u32 %s57, 1
        %s439 = smul.addr %s438, 8
        %s440 = scalar_lea.vmem [#allocation2], %s439
        %p441 = pneg %p70
        %p442 = pneg %p67
        %s443 = sand.u32 %s35, 1
        %s444 = scalar_lea.sflag [#allocation6], %s443
        %s445 = sand.u32 %s85, 1
        %s446 = smul.addr %s445, 8
        %s447 = scalar_lea.vmem [#allocation5], %s446
        %p448 = pneg %p98
        %p449 = pneg %p95
        %p450 = pneg %p119
        %p451 = pneg %p116
        %p452 = pneg %p140
        %p453 = pneg %p137
        %p454 = pneg %p161
        %p455 = pneg %p158
        %p456 = pneg %p182
        %p457 = pneg %p179
        %p458 = pneg %p203
        %p459 = pneg %p200
        %p460 = pneg %p224
        %p461 = pneg %p221
        %p462 = pneg %p252
        %p463 = pneg %p249
        %s464 = sand.u32 %s239, 1
        %s465 = scalar_lea.sflag [#allocation4], %s464
        %s466 = sand.u32 %s239, 1
        %s467 = smul.addr %s466, 16
        %s468 = scalar_lea.vmem [#allocation10], %s467
        %p469 = pneg %p280
        %p470 = pneg %p277
        %s471 = sand.u32 %s35, 1
        %s472 = scalar_lea.sflag [#allocation12], %s471
        %s473 = sand.u32 %s267, 1
        %s474 = smul.addr %s473, 16
        %s475 = scalar_lea.vmem [#allocation11], %s474
        %p476 = pneg %p308
        %p477 = pneg %p305
        %s478 = sand.u32 %s35, 1
        %s479 = scalar_lea.sflag [#allocation12], %s478
        %s480 = sand.u32 %s295, 1
        %s481 = smul.addr %s480, 16
        %s482 = scalar_lea.vmem [#allocation13], %s481
        %v484 = vld [vmem:[%s6] sm:$0x1]
        %v485 = vld [vmem:[%s7] sm:$0x1]
        %v486 = vld [vmem:[%s414] sm:$0xff]
        %vm487 = vcmask 261120
        %v488 = vsel %vm487, %v486, 0.0
        %489 = vadd.xlane.f32.xlu0 %v488
        %v490 = vpop.xlane.xlu0 %489
        %v491 = vrcp.pop 32.0
        %v492 = vmul.f32 %v490, %v491
        %v493 = vsub.f32 %v486, %v492
        %v494 = vmul.f32 %v493, %v493
        %v495 = vsel %vm487, %v494, 0.0
        %496 = vadd.xlane.f32.xlu0 %v495
        %v497 = vpop.xlane.xlu0 %496
        %v498 = vmul.f32 %v497, %v491
        %v499 = vadd.f32 %v498, 1e-05
        %v500 = vrsqrt.pop %v499
        %v501 = vmul.f32 %v493, %v500
        %v503 = vlaneseq
        %v504 = vshrl.u32 %v503, 7
        %v505 = vsub.s32 0, %v504
        %v506 = vrot.slane %v484, %v505
        %v508 = vmul.f32 %v501, %v506
        %v510 = vlaneseq
        %v511 = vshrl.u32 %v510, 7
        %v512 = vsub.s32 0, %v511
        %v513 = vrot.slane %v485, %v512
        %v515 = vadd.f32 %v508, %v513
        %v516 = vpack.c.bf16 %v515, %v515
        %v517 = vld [vmem:[#allocation7] sm:$0xf]
        %v518 = vld [vmem:[#allocation7 + $0x4] sm:$0xf]
        %v519 = vld [vmem:[#allocation7 + $0x8] sm:$0xf]
        %v520 = vld [vmem:[#allocation7 + $0xc] sm:$0xf]
        %v521 = vld [vmem:[%s3] sm:$0x1]
        %v523 = vlaneseq
        %v524 = vshrl.u32 %v523, 7
        %v525 = vsub.s32 0, %v524
        %v526 = vrot.slane %v521, %v525
        %v532 = vunpack.c.l.b16 %v517
        %v533 = vunpack.c.l.b16 %v518
        %v534 = vunpack.c.l.b16 %v519
        %v535 = vunpack.c.l.b16 %v520
        %v536 = vpack.c.b16 %v533, %v532
        %v537 = vpack.c.b16 %v535, %v534
        %v541 = vsel %vm487, %v516, 0
        %543 = vmatprep.subr.bf16.mxu0 0
        %544 = vmatpush1.bf16.msra.mxu0 %v536
        %545 = vmatprep.subr.bf16.mxu0 0
        %546 = vmatpush1.bf16.msra.mxu0 %v537
        %547 = vmatprep.subr.bf16.mxu0 0
        %548 = vmatpush1.bf16.msra.mxu0 0
        %549 = vmatprep.subr.bf16.mxu0 0
        %550 = vmatpush1.bf16.msra.mxu0 0
        %551 = vmatprep.subr.bf16.mxu0 0
        %552 = vmatpush1.bf16.msra.mxu0 0
        %553 = vmatprep.subr.bf16.mxu0 0
        %554 = vmatpush1.bf16.msra.mxu0 0
        %555 = vmatprep.subr.bf16.mxu0 0
        %556 = vmatpush1.bf16.msra.mxu0 0
        %557 = vmatprep.subr.bf16.mxu0 0
        %558 = vmatpush1.bf16.msra.mxu0 0
        %559 = vmatprep.subr.bf16.mxu0 0
        %560 = vmatpush1.bf16.msra.mxu0 0
        %561 = vmatprep.subr.bf16.mxu0 0
        %562 = vmatpush1.bf16.msra.mxu0 0
        %563 = vmatprep.subr.bf16.mxu0 0
        %564 = vmatpush1.bf16.msra.mxu0 0
        %565 = vmatprep.subr.bf16.mxu0 0
        %566 = vmatpush1.bf16.msra.mxu0 0
        %567 = vmatprep.subr.bf16.mxu0 0
        %568 = vmatpush1.bf16.msra.mxu0 0
        %569 = vmatprep.subr.bf16.mxu0 0
        %570 = vmatpush1.bf16.msra.mxu0 0
        %571 = vmatprep.subr.bf16.mxu0 0
        %572 = vmatpush1.bf16.msra.mxu0 0
        %573 = vmatprep.subr.bf16.mxu0 0
        %574 = vmatpush1.bf16.msra.mxu0 0
        %575 = vmatprep.mubr.bf16.mxu0 0
        %576 = vmatmul.mubr.bf16.gmra.mrb[0].mxu0 %v541
        %v577 = vpop.f32.mrb[0].mxu0
        %v578 = vadd.f32 %v526, %v577
        %v579 = vpop.f32.mrb[0].mxu0
        %v580 = vpop.f32.mrb[0].mxu0
        %v581 = vpop.f32.mrb[0].mxu0
        %582 = vdwg.mxu0
        %v583 = vmul.f32 %v578, 0.35355338
        %v584 = vpack.c.bf16 %v583, %v583
        %v585 = vld [vmem:[%s423] sm:$0xff]
        %v586 = vsel %vm487, %v585, 0.0
        %587 = vadd.xlane.f32.xlu0 %v586
        %v588 = vpop.xlane.xlu0 %587
        %v589 = vmul.f32 %v588, %v491
        %v590 = vsub.f32 %v585, %v589
        %v591 = vmul.f32 %v590, %v590
        %v592 = vsel %vm487, %v591, 0.0
        %593 = vadd.xlane.f32.xlu0 %v592
        %v594 = vpop.xlane.xlu0 %593
        %v595 = vmul.f32 %v594, %v491
        %v596 = vadd.f32 %v595, 1e-05
        %v597 = vrsqrt.pop %v596
        %v598 = vmul.f32 %v590, %v597
        %v599 = vmul.f32 %v598, %v506
        %v600 = vadd.f32 %v599, %v513
        %v601 = vpack.c.bf16 %v600, %v600
        %v602 = vld [vmem:[#allocation8] sm:$0xf]
        %v603 = vld [vmem:[#allocation8 + $0x4] sm:$0xf]
        %v604 = vld [vmem:[#allocation8 + $0x8] sm:$0xf]
        %v605 = vld [vmem:[#allocation8 + $0xc] sm:$0xf]
        %v606 = vld [vmem:[%s5] sm:$0x1]
        %v608 = vlaneseq
        %v609 = vshrl.u32 %v608, 7
        %v610 = vsub.s32 0, %v609
        %v611 = vrot.slane %v606, %v610
        %v617 = vunpack.c.l.b16 %v602
        %v618 = vunpack.c.l.b16 %v603
        %v619 = vunpack.c.l.b16 %v604
        %v620 = vunpack.c.l.b16 %v605
        %v621 = vpack.c.b16 %v618, %v617
        %v622 = vpack.c.b16 %v620, %v619
        %v626 = vsel %vm487, %v601, 0
        %628 = vmatprep.subr.bf16.mxu0 0
        %629 = vmatpush1.bf16.msra.mxu0 %v621
        %630 = vmatprep.subr.bf16.mxu0 0
        %631 = vmatpush1.bf16.msra.mxu0 %v622
        %632 = vmatprep.subr.bf16.mxu0 0
        %633 = vmatpush1.bf16.msra.mxu0 0
        %634 = vmatprep.subr.bf16.mxu0 0
        %635 = vmatpush1.bf16.msra.mxu0 0
        %636 = vmatprep.subr.bf16.mxu0 0
        %637 = vmatpush1.bf16.msra.mxu0 0
        %638 = vmatprep.subr.bf16.mxu0 0
        %639 = vmatpush1.bf16.msra.mxu0 0
        %640 = vmatprep.subr.bf16.mxu0 0
        %641 = vmatpush1.bf16.msra.mxu0 0
        %642 = vmatprep.subr.bf16.mxu0 0
        %643 = vmatpush1.bf16.msra.mxu0 0
        %644 = vmatprep.subr.bf16.mxu0 0
        %645 = vmatpush1.bf16.msra.mxu0 0
        %646 = vmatprep.subr.bf16.mxu0 0
        %647 = vmatpush1.bf16.msra.mxu0 0
        %648 = vmatprep.subr.bf16.mxu0 0
        %649 = vmatpush1.bf16.msra.mxu0 0
        %650 = vmatprep.subr.bf16.mxu0 0
        %651 = vmatpush1.bf16.msra.mxu0 0
        %652 = vmatprep.subr.bf16.mxu0 0
        %653 = vmatpush1.bf16.msra.mxu0 0
        %654 = vmatprep.subr.bf16.mxu0 0
        %655 = vmatpush1.bf16.msra.mxu0 0
        %656 = vmatprep.subr.bf16.mxu0 0
        %657 = vmatpush1.bf16.msra.mxu0 0
        %658 = vmatprep.subr.bf16.mxu0 0
        %659 = vmatpush1.bf16.msra.mxu0 0
        %660 = vmatprep.mubr.bf16.mxu0 0
        %661 = vmatmul.mubr.bf16.gmra.mrb[0].mxu0 %v626
        %v662 = vpop.f32.mrb[0].mxu0
        %v663 = vadd.f32 %v611, %v662
        %v664 = vpop.f32.mrb[0].mxu0
        %v665 = vpop.f32.mrb[0].mxu0
        %v666 = vpop.f32.mrb[0].mxu0
        %667 = vdwg.mxu0
        %v668 = vpack.c.bf16 %v663, %v663
        %vm669 = vcmask 60416
        %670 = vst.msk [vmem:[%s468] sm:$0xf] %vm669, %v584
        %671 = vst.msk [vmem:[%s475] sm:$0xf] %vm669, %v668
        %v673 = vunpack.c.l.b16 %v668
        %v674 = vpack.c.b16 %v673, %v673
        %675 = vrot.lane.b32.xlu0 %v674, 96
        %v676 = vpop.permute.xlu0 %675
        %678 = vst.msk [vmem:[%s482] sm:$0xf] %vm669, %v676
        %v680 = vunpack.c.l.b16 %v584
        %v681 = vpack.c.b16 %v680, %v680
        %682 = vrot.lane.b32.xlu0 %v681, 120
        %v683 = vpop.permute.xlu0 %682
        %s685 = scalar_lea.vmem %s468, 4 [#allocation10]
        %686 = vst.msk [vmem:[%s685] sm:$0xf] %vm669, %v683
        %687 = vrot.lane.b32.xlu0 %v674, 120
        %v688 = vpop.permute.xlu0 %687
        %s690 = scalar_lea.vmem %s475, 4 [#allocation11]
        %691 = vst.msk [vmem:[%s690] sm:$0xf] %vm669, %v688
        %692 = vrot.lane.b32.xlu0 %v674, 88
        %v693 = vpop.permute.xlu0 %692
        %s695 = scalar_lea.vmem %s482, 4 [#allocation13]
        %696 = vst.msk [vmem:[%s695] sm:$0xf] %vm669, %v693
        %697 = vrot.lane.b32.xlu0 %v681, 112
        %v698 = vpop.permute.xlu0 %697
        %s700 = scalar_lea.vmem %s468, 8 [#allocation10]
        %701 = vst.msk [vmem:[%s700] sm:$0xf] %vm669, %v698
        %702 = vrot.lane.b32.xlu0 %v674, 112
        %v703 = vpop.permute.xlu0 %702
        %s705 = scalar_lea.vmem %s475, 8 [#allocation11]
        %706 = vst.msk [vmem:[%s705] sm:$0xf] %vm669, %v703
        %707 = vrot.lane.b32.xlu0 %v674, 80
        %v708 = vpop.permute.xlu0 %707
        %s710 = scalar_lea.vmem %s482, 8 [#allocation13]
        %711 = vst.msk [vmem:[%s710] sm:$0xf] %vm669, %v708
        %712 = vrot.lane.b32.xlu0 %v681, 104
        %v713 = vpop.permute.xlu0 %712
        %s715 = scalar_lea.vmem %s468, 12 [#allocation10]
        %716 = vst.msk [vmem:[%s715] sm:$0xf] %vm669, %v713
        %717 = vrot.lane.b32.xlu0 %v674, 104
        %v718 = vpop.permute.xlu0 %717
        %s720 = scalar_lea.vmem %s475, 12 [#allocation11]
        %721 = vst.msk [vmem:[%s720] sm:$0xf] %vm669, %v718
        %722 = vrot.lane.b32.xlu0 %v674, 72
        %v723 = vpop.permute.xlu0 %722
        %s725 = scalar_lea.vmem %s482, 12 [#allocation13]
        %726 = vst.msk [vmem:[%s725] sm:$0xf] %vm669, %v723
        %s727 = sand.u32 %s239, 1
        %s728 = scalar_lea.sflag [#allocation4], %s727
        %s729 = sand.u32 %s239, 1
        %s730 = smul.addr %s729, 16
        %s731 = scalar_lea.vmem [#allocation10], %s730
        %s732 = sand.u32 %s35, 1
        %s733 = scalar_lea.sflag [#allocation12], %s732
        %s734 = sand.u32 %s267, 1
        %s735 = smul.addr %s734, 16
        %s736 = scalar_lea.vmem [#allocation11], %s735
        %s737 = sand.u32 %s35, 1
        %s738 = scalar_lea.sflag [#allocation12], %s737
        %s739 = sand.u32 %s295, 1
        %s740 = smul.addr %s739, 16
        %s741 = scalar_lea.vmem [#allocation13], %s740
        // Predicated region
        $region69: #{tpu_custom_call.1} parent=51 // pred_check
          %p742 = pneg %p249
        $region70: #{tpu_custom_call.1} parent=51 // pred_check_branch
          %744 = sbr.rel (%p742) target = $region72
        $region71: #{tpu_custom_call.1} parent=51 // pred_region
          %s746 = ssub.s32 256, 256
          %747 = vsyncadd %s728, %s746
          %s748 = smul.addr %s39, 4
          %s749 = sadd.s32 %s40, %s748
          %s750 = smul.addr %s749, 64
          %s751 = scalar_lea.hbm %s8, %s750
          %s752 = sshll.u32 %s731, 4
          %s753 = int_to_ptr.vmem [resolvable:$true] %s752
          %758 = dma.vmem_to_hbm [thread:$0]  %s753, 256, %s751, %s728, 64, 64, 4
        $region72: #{tpu_custom_call.1} parent=51 // pred_fallthru
          _
        // Predicated region
        $region73: #{tpu_custom_call.1} parent=51 // pred_check
          %p759 = pneg %p277
        $region74: #{tpu_custom_call.1} parent=51 // pred_check_branch
          %761 = sbr.rel (%p759) target = $region76
        $region75: #{tpu_custom_call.1} parent=51 // pred_region
          %s763 = ssub.s32 256, 256
          %764 = vsyncadd %s733, %s763
          %s765 = smul.addr %s39, 4
          %s766 = sadd.s32 %s40, %s765
          %s767 = smul.addr %s766, 64
          %s768 = scalar_lea.hbm %s9, %s767
          %s769 = sshll.u32 %s736, 4
          %s770 = int_to_ptr.vmem [resolvable:$true] %s769
          %775 = dma.vmem_to_hbm [thread:$0]  %s770, 256, %s768, %s733, 64, 64, 4
        $region76: #{tpu_custom_call.1} parent=51 // pred_fallthru
          _
        // Predicated region
        $region77: #{tpu_custom_call.1} parent=51 // pred_check
          %p776 = pneg %p305
        $region78: #{tpu_custom_call.1} parent=51 // pred_check_branch
          %778 = sbr.rel (%p776) target = $region80
        $region79: #{tpu_custom_call.1} parent=51 // pred_region
          %s780 = ssub.s32 256, 256
          %781 = vsyncadd %s738, %s780
          %s782 = smul.addr %s39, 4
          %s783 = sadd.s32 %s40, %s782
          %s784 = smul.addr %s783, 64
          %s785 = scalar_lea.hbm %s10, %s784
          %s786 = sshll.u32 %s741, 4
          %s787 = int_to_ptr.vmem [resolvable:$true] %s786
          %792 = dma.vmem_to_hbm [thread:$0]  %s787, 256, %s785, %s738, 64, 64, 4
        $region80: #{tpu_custom_call.1} parent=51 // pred_fallthru
          _
      $region52: #{tpu_custom_call.1} parent=5 // pred_fallthru
        _
      %p793 = scmp.le.s32.totalorder 2, %s30
      // Predicated region
      $region81: #{tpu_custom_call.1} parent=5 // pred_check
        %p794 = pneg %p793
      $region82: #{tpu_custom_call.1} parent=5 // pred_check_branch
        %796 = sbr.rel (%p794) target = $region84
      $region83: #{tpu_custom_call.1} parent=5 // pred_region
        %s797 = ssub.s32 %s30, 2
        // Predicated region
        $region85: #{tpu_custom_call.1} parent=83 // pred_check
          %p798 = pneg %p255
        $region86: #{tpu_custom_call.1} parent=83 // pred_check_branch
          %800 = sbr.rel (%p798) target = $region88
        $region87: #{tpu_custom_call.1} parent=83 // pred_region
          %s801 = sand.u32 %s240, 1
          %s802 = scalar_lea.sflag [#allocation4], %s801
          %s803 = sand.u32 %s240, 1
          %s804 = smul.addr %s803, 16
          %s805 = scalar_lea.vmem [#allocation10], %s804
          %806 = dma.done %s802, 256
        $region88: #{tpu_custom_call.1} parent=83 // pred_fallthru
          _
        // Predicated region
        $region89: #{tpu_custom_call.1} parent=83 // pred_check
          %p807 = pneg %p283
        $region90: #{tpu_custom_call.1} parent=83 // pred_check_branch
          %809 = sbr.rel (%p807) target = $region92
        $region91: #{tpu_custom_call.1} parent=83 // pred_region
          %s810 = sand.u32 %s36, 1
          %s811 = scalar_lea.sflag [#allocation12], %s810
          %s812 = sand.u32 %s268, 1
          %s813 = smul.addr %s812, 16
          %s814 = scalar_lea.vmem [#allocation11], %s813
          %815 = dma.done %s811, 256
        $region92: #{tpu_custom_call.1} parent=83 // pred_fallthru
          _
        // Predicated region
        $region93: #{tpu_custom_call.1} parent=83 // pred_check
          %p816 = pneg %p311
        $region94: #{tpu_custom_call.1} parent=83 // pred_check_branch
          %818 = sbr.rel (%p816) target = $region96
        $region95: #{tpu_custom_call.1} parent=83 // pred_region
          %s819 = sand.u32 %s36, 1
          %s820 = scalar_lea.sflag [#allocation12], %s819
          %s821 = sand.u32 %s296, 1
          %s822 = smul.addr %s821, 16
          %s823 = scalar_lea.vmem [#allocation13], %s822
          %824 = dma.done %s820, 256
        $region96: #{tpu_custom_call.1} parent=83 // pred_fallthru
          _
      $region84: #{tpu_custom_call.1} parent=5 // pred_fallthru
        _
    $region6: #{tpu_custom_call.1} parent=1 // loop_footer
      %s34 = sadd.s32 1, %s30
    $region7: #{tpu_custom_call.1} parent=1 // loop_footer_branch
      %29 = sbr.rel target = $region3
    $region8: #{tpu_custom_call.1} parent=1 // loop_exit
      _
    %825 = vsyncpa [#allocation3], 1
    %s826 = scalar_lea.sflag [#allocation3], 1
    %827 = vsyncpa %s826, 1
    %828 = vsyncpa [#allocation6], 1
    %s829 = scalar_lea.sflag [#allocation6], 1
    %830 = vsyncpa %s829, 1
    %831 = vsyncpa [#allocation9], 1
    %832 = vsyncpa [#allocation4], 1
    %s833 = scalar_lea.sflag [#allocation4], 1
    %834 = vsyncpa %s833, 1
    %835 = vsyncpa [#allocation12], 1
    %s836 = scalar_lea.sflag [#allocation12], 1
    %837 = vsyncpa %s836, 1

</llo_original>
